<compile_context>
chip_gen: v7x
topology: tpu7x:2x2x1
jax: 0.10.0
libtpu: 0.0.40
codegen_flags: <defaults>
</compile_context>

<pallas_src>
import functools

import jax
import jax.numpy as jnp
from jax import lax
from jax.experimental import pallas as pl
from jax.experimental.pallas import tpu as pltpu


def _gsconv_kernel(x_ref, w1_ref, b1_ref, w2_ref, b2_ref, o_ref, *, H, W, head, runs):
    # x_ref : (1, c1, HWtot)  zero-padded flattened spatial:
    #                         [ head zeros | H*W image | >= 2*W zeros | pad ]
    # w1_ref: (c_, c1)        BN-folded, channel-permuted 1x1 weight (act dtype)
    # b1_ref: (c_, 1)         folded bias (f32)
    # w2_ref: (c_, 25)        BN-folded, channel-permuted depthwise 5x5 weight (f32)
    # b2_ref: (c_, 1)         folded bias (f32)
    # o_ref : (1, 2*c_, HWo)  shuffled output, lane-aligned unpadded extent
    HWtot = x_ref.shape[-1]
    HWo = o_ref.shape[-1]
    HW = H * W
    x = x_ref[0]                                              # (c1, HWtot)

    # ---- cv1: 1x1 conv == channel matmul on the MXU, f32 accumulation ----
    y1 = jnp.dot(w1_ref[...], x, preferred_element_type=jnp.float32) + b1_ref[...]
    x1 = y1 * jax.nn.sigmoid(y1)                              # SiLU, (c_, HWtot) f32

    # Zero everything outside the image interior [head, head+HW): the padded
    # columns of y1 equal b1, so SiLU(b1) != 0 would otherwise leak into the
    # 5x5 taps.  After this, no row-validity masks are needed in the tap loop.
    idx = lax.broadcasted_iota(jnp.int32, (1, HWtot), 1)
    interior = (idx >= head) & (idx < head + HW)
    x1 = jnp.where(interior, x1, 0.0)

    # Column-premasked copies of x1 (one per dx != 0): zero the *source* columns
    # whose shifted read would wrap across a row boundary.  4 selects total
    # instead of a mask+select per tap.
    col = (idx - head) % W
    xs = {0: x1}
    for dx in (-2, -1, 1, 2):
        if dx > 0:
            xs[dx] = jnp.where(col >= dx, x1, 0.0)
        else:
            xs[dx] = jnp.where(col < W + dx, x1, 0.0)

    # ---- cv2: depthwise 5x5 conv (pad=2): 25 x (XLU roll + VPU mul/add) ----
    # TODO(synk): on v6e/v7x a bf16 tap loop (pack 2x per vreg) would roughly
    # halve the remaining VPU work; kept f32 here for accuracy across chips.
    w2 = w2_ref[...]                                          # (c_, 25)
    acc = jnp.zeros_like(x1)
    for ky in range(5):
        for kx in range(5):
            dy, dx = ky - 2, kx - 2
            off = dy * W + dx
            src = xs[dx]
            if off != 0:
                src = pltpu.roll(src, (-off) % HWtot, 1)      # lane rotate on XLU
            acc = acc + w2[:, ky * 5 + kx:ky * 5 + kx + 1] * src
    y2 = acc + b2_ref[...]
    x2 = y2 * jax.nn.sigmoid(y2)                              # SiLU, (c_, HWtot) f32

    # ---- channel shuffle: static contiguous slab stores ----
    # Weight rows were pre-permuted evens-then-odds in the wrapper, so every run
    # is a contiguous channel slab.  Only the lane-aligned extent
    # [head, head+HWo) is stored so the wrapper never re-reads output via HBM.
    x1o = x1[:, head:head + HWo].astype(o_ref.dtype)
    x2o = x2[:, head:head + HWo].astype(o_ref.dtype)
    for dst0, srci, src0, n in runs:
        src = x1o if srci == 0 else x2o
        o_ref[0, dst0:dst0 + n, :] = src[src0:src0 + n, :]


def _fold_bn(w, gamma, beta, mean, var, eps):
    scale = gamma / jnp.sqrt(var + eps)
    return w * scale[:, None, None, None], beta - mean * scale


def _round_up(v, m):
    return ((v + m - 1) // m) * m


def gsconv(x, w1, bn1, w2, bn2, *, eps=1e-3):
    """GSConv forward. x:(B,c1,H,W); w1:(c_,c1,1,1); w2:(c_,1,5,5);
    bn*: (gamma, beta, running_mean, running_var) each (c_,). Returns (B,2c_,H,W)."""
    B, c1, H, W = x.shape
    c_ = w1.shape[0]
    c2 = 2 * c_
    assert w1.shape == (c_, c1, 1, 1) and w2.shape == (c_, 1, 5, 5)
    # TODO(synk): only GSConv's default cv1 (k=1, s=1, g=1) is implemented; a
    # general k/s grouped cv1 would need an im2col or halo-tiled spatial kernel.
    # TODO(synk): for v7x (64 MiB VMEM) with large feature maps the per-batch
    # slab should be split into H-tiles with a 2-row halo (manual
    # make_async_copy double-buffering), which also gives pipeline depth > B.

    w1f, b1f = _fold_bn(w1, *bn1, eps)
    w2f, b2f = _fold_bn(w2, *bn2, eps)

    # Permute cv1/cv2 output channels to evens-then-odds so the GSConv shuffle
    # becomes a few contiguous slab copies inside the kernel.
    perm = list(range(0, c_, 2)) + list(range(1, c_, 2))
    inv = [0] * c_
    for i, p in enumerate(perm):
        inv[p] = i
    perm_idx = jnp.array(perm, dtype=jnp.int32)
    # cv1 weight in the activation dtype -> native bf16 MXU path for bf16 inputs
    # (f32 accumulation comes from preferred_element_type); biases & dw stay f32.
    w1p = w1f.reshape(c_, c1)[perm_idx].astype(x.dtype)
    b1p = b1f[perm_idx].reshape(c_, 1).astype(jnp.float32)
    w2p = w2f.reshape(c_, 25)[perm_idx].astype(jnp.float32)
    b2p = b2f[perm_idx].reshape(c_, 1).astype(jnp.float32)

    # Static shuffle plan: out channel co takes cat channel (2*co) for co<c_,
    # else (2*(co-c_)+1); mapped into permuted coordinates and merged into runs
    # (dst_start, source[0=x1, 1=dw], src_start, length).
    runs = []
    for co in range(c2):
        s = 2 * co if co < c_ else 2 * (co - c_) + 1
        srci, ch = (0, inv[s]) if s < c_ else (1, inv[s - c_])
        if runs and runs[-1][1] == srci and runs[-1][2] + runs[-1][3] == ch:
            d0, sr, c0, n = runs[-1]
            runs[-1] = (d0, sr, c0, n + 1)
        else:
            runs.append((co, srci, ch, 1))
    runs = tuple(runs)

    # Lane-dense layout with zeroed halos:
    #   [ head zeros | H*W image | >= 2*W zeros, padded to a multiple of 128 ]
    # head is a multiple of 128 (and >= 2*W) so the kernel's output slice is
    # lane-aligned; >= 2*W zeros on each side removes all row-validity masks.
    HW = H * W
    head = _round_up(2 * W, 128)
    HWtot = head + _round_up(HW + 2 * W, 128)
    HWo = _round_up(HW, 128)
    x_flat = x.reshape(B, c1, HW)
    x_flat = jnp.pad(x_flat, ((0, 0), (0, 0), (head, HWtot - head - HW)))

    itemsize = jnp.dtype(x.dtype).itemsize
    cost = pl.CostEstimate(
        flops=B * (2 * c_ * c1 * HWtot + (2 * 25 + 8) * c_ * HWtot),
        transcendentals=B * 2 * c_ * HWtot,
        bytes_accessed=(B * c1 * HWtot + B * c2 * HWo) * itemsize
        + w1p.size * itemsize + (b1p.size + w2p.size + b2p.size) * 4,
    )

    # Generation-aware VMEM budget (v5e/v6e: 128 MiB physical, v7x: 64 MiB).
    try:
        vmem_limit = int(pltpu.get_tpu_info().vmem_capacity_bytes * 0.45)
    except Exception:
        vmem_limit = 32 * 1024 * 1024

    kernel = functools.partial(_gsconv_kernel, H=H, W=W, head=head, runs=runs)
    out_flat = pl.pallas_call(
        kernel,
        out_shape=jax.ShapeDtypeStruct((B, c2, HWo), x.dtype),
        grid_spec=pltpu.PrefetchScalarGridSpec(
            num_scalar_prefetch=0,
            grid=(B,),
            in_specs=[
                pl.BlockSpec((1, c1, HWtot), lambda b: (b, 0, 0)),
                pl.BlockSpec((c_, c1), lambda b: (0, 0)),
                pl.BlockSpec((c_, 1), lambda b: (0, 0)),
                pl.BlockSpec((c_, 25), lambda b: (0, 0)),
                pl.BlockSpec((c_, 1), lambda b: (0, 0)),
            ],
            out_specs=pl.BlockSpec((1, c2, HWo), lambda b: (b, 0, 0)),
        ),
        compiler_params=pltpu.CompilerParams(
            dimension_semantics=("parallel",),
            vmem_limit_bytes=vmem_limit,
        ),
        cost_estimate=cost,
    )(x_flat, w1p, b1p, w2p, b2p)

    if HWo == HW:
        return out_flat.reshape(B, c2, H, W)
    return out_flat[:, :, :HW].reshape(B, c2, H, W)


# ----------------------------- pure-JAX reference -----------------------------
def _silu(x):
    return x * jax.nn.sigmoid(x)


def gsconv_ref(x, w1, bn1, w2, bn2, *, eps=1e-3):
    c_ = w1.shape[0]

    def bn(y, p):
        g, b, m, v = p
        return (y - m[None, :, None, None]) * (
            g[None, :, None, None] / jnp.sqrt(v[None, :, None, None] + eps)
        ) + b[None, :, None, None]

    y1 = lax.conv_general_dilated(
        x, w1, (1, 1), "VALID",
        dimension_numbers=("NCHW", "OIHW", "NCHW"),
        precision=lax.Precision.HIGHEST)
    y1 = _silu(bn(y1, bn1))
    y2 = lax.conv_general_dilated(
        y1, w2, (1, 1), ((2, 2), (2, 2)),
        dimension_numbers=("NCHW", "OIHW", "NCHW"),
        feature_group_count=c_,
        precision=lax.Precision.HIGHEST)
    y2 = _silu(bn(y2, bn2))
    x2 = jnp.concatenate([y1, y2], axis=1)
    b, n, h, w = x2.shape
    y = x2.reshape(b * n // 2, 2, h * w)
    y = jnp.transpose(y, (1, 0, 2))
    y = y.reshape(2, -1, n // 2, h, w)
    return jnp.concatenate([y[0], y[1]], axis=1)


if __name__ == "__main__":
    B, c1, c2, H, W = 2, 8, 8, 16, 16
    c_ = c2 // 2

    key = jax.random.PRNGKey(0)
    ks = jax.random.split(key, 11)
    x = jax.random.normal(ks[0], (B, c1, H, W), dtype=jnp.float32)
    w1 = jax.random.normal(ks[1], (c_, c1, 1, 1), dtype=jnp.float32) * 0.3
    w2 = jax.random.normal(ks[2], (c_, 1, 5, 5), dtype=jnp.float32) * 0.2
    bn1 = (1.0 + 0.1 * jax.random.normal(ks[3], (c_,), dtype=jnp.float32),
           0.1 * jax.random.normal(ks[4], (c_,), dtype=jnp.float32),
           0.1 * jax.random.normal(ks[5], (c_,), dtype=jnp.float32),
           jax.random.uniform(ks[6], (c_,), dtype=jnp.float32, minval=0.5, maxval=1.5))
    bn2 = (1.0 + 0.1 * jax.random.normal(ks[7], (c_,), dtype=jnp.float32),
           0.1 * jax.random.normal(ks[8], (c_,), dtype=jnp.float32),
           0.1 * jax.random.normal(ks[9], (c_,), dtype=jnp.float32),
           jax.random.uniform(ks[10], (c_,), dtype=jnp.float32, minval=0.5, maxval=1.5))

    out = gsconv(x, w1, bn1, w2, bn2)
    out = jax.block_until_ready(out)

    ref = gsconv_ref(x, w1, bn1, w2, bn2)
    assert out.shape == (B, c2, H, W)
    err = jnp.max(jnp.abs(out - ref))
    assert jnp.allclose(out, ref, atol=1e-3, rtol=1e-3), f"mismatch vs reference (max abs err {err})"

    print("KERNEL_OK")
</pallas_src>

<mosaic_0001>
module attributes {stable_mosaic.version = 11 : i64} {
  func.func @_gsconv_kernel(%arg0: i32, %arg1: memref<1x8x512xf32, #tpu.memory_space<vmem>>, %arg2: memref<4x8xf32, #tpu.memory_space<vmem>>, %arg3: memref<4x1xf32, #tpu.memory_space<vmem>>, %arg4: memref<4x25xf32, #tpu.memory_space<vmem>>, %arg5: memref<4x1xf32, #tpu.memory_space<vmem>>, %arg6: memref<1x8x256xf32, #tpu.memory_space<vmem>>) attributes {dimension_semantics = [#tpu.dimension_semantics<parallel>], iteration_bounds = array<i64: 2>, scalar_prefetch = 0 : i64, scratch_operands = 0 : i64, tpu.core_type = #tpu.core_type<tc>, window_params = [{transform_indices = @transform_0, window_bounds = array<i64: 1, 8, 512>}, {pipeline_mode = #tpu.pipeline_mode<synchronous>, transform_indices = @transform_1, window_bounds = array<i64: 4, 8>}, {pipeline_mode = #tpu.pipeline_mode<synchronous>, transform_indices = @transform_2, window_bounds = array<i64: 4, 1>}, {pipeline_mode = #tpu.pipeline_mode<synchronous>, transform_indices = @transform_3, window_bounds = array<i64: 4, 25>}, {pipeline_mode = #tpu.pipeline_mode<synchronous>, transform_indices = @transform_4, window_bounds = array<i64: 4, 1>}, {transform_indices = @transform_5, window_bounds = array<i64: 1, 8, 256>}]} {
    %c0 = arith.constant 0 : index
    %c0_0 = arith.constant 0 : index
    %c0_1 = arith.constant 0 : index
    %0 = vector.load %arg1[%c0, %c0_0, %c0_1] : memref<1x8x512xf32, #tpu.memory_space<vmem>>, vector<1x8x512xf32>
    %1 = vector.shape_cast %0 : vector<1x8x512xf32> to vector<8x512xf32>
    %c0_2 = arith.constant 0 : index
    %c0_3 = arith.constant 0 : index
    %2 = vector.load %arg2[%c0_2, %c0_3] : memref<4x8xf32, #tpu.memory_space<vmem>>, vector<4x8xf32>
    %cst = arith.constant dense<0.000000e+00> : vector<4x512xf32>
    %3 = tpu.matmul %2, %1, %cst {dimension_numbers = #tpu.dot_dimension_numbers<[1], [0], [0], [1], [0, 0, 1, 1], [], []>} : vector<4x8xf32>, vector<8x512xf32>, vector<4x512xf32> -> vector<4x512xf32>
    %c0_4 = arith.constant 0 : index
    %c0_5 = arith.constant 0 : index
    %4 = vector.load %arg3[%c0_4, %c0_5] : memref<4x1xf32, #tpu.memory_space<vmem>>, vector<4x1xf32>
    %5 = vector.broadcast %4 : vector<4x1xf32> to vector<4x512xf32>
    %6 = arith.addf %3, %5 : vector<4x512xf32>
    %7 = arith.negf %6 : vector<4x512xf32>
    %8 = math.exp %7 : vector<4x512xf32>
    %cst_6 = arith.constant 1.000000e+00 : f32
    %9 = vector.broadcast %cst_6 : f32 to vector<4x512xf32>
    %10 = arith.addf %9, %8 : vector<4x512xf32>
    %11 = arith.divf %9, %10 : vector<4x512xf32>
    %12 = arith.mulf %6, %11 : vector<4x512xf32>
    %13 = tpu.iota {dimensions = array<i32: 1>} : vector<1x512xi32>
    %c128_i32 = arith.constant 128 : i32
    %14 = vector.broadcast %c128_i32 : i32 to vector<1x512xi32>
    %15 = arith.cmpi sge, %13, %14 : vector<1x512xi32>
    %c384_i32 = arith.constant 384 : i32
    %16 = vector.broadcast %c384_i32 : i32 to vector<1x512xi32>
    %17 = arith.cmpi slt, %13, %16 : vector<1x512xi32>
    %18 = arith.andi %15, %17 : vector<1x512xi1>
    %cst_7 = arith.constant 0.000000e+00 : f32
    %19 = vector.shape_cast %18 : vector<1x512xi1> to vector<1x512xi1>
    %20 = vector.broadcast %19 : vector<1x512xi1> to vector<4x512xi1>
    %21 = vector.broadcast %cst_7 : f32 to vector<4x512xf32>
    %22 = arith.select %20, %12, %21 : vector<4x512xi1>, vector<4x512xf32>
    %c128_i32_8 = arith.constant 128 : i32
    %23 = vector.broadcast %c128_i32_8 : i32 to vector<1x512xi32>
    %24 = arith.subi %13, %23 : vector<1x512xi32>
    %c16_i32 = arith.constant 16 : i32
    %c0_i32 = arith.constant 0 : i32
    %25 = arith.cmpi eq, %c16_i32, %c0_i32 : i32
    %c1_i32 = arith.constant 1 : i32
    %26 = arith.select %25, %c1_i32, %c16_i32 : i32
    %27 = vector.broadcast %26 : i32 to vector<1x512xi32>
    %28 = arith.remsi %24, %27 : vector<1x512xi32>
    %c0_i32_9 = arith.constant 0 : i32
    %29 = vector.broadcast %c0_i32_9 : i32 to vector<1x512xi32>
    %30 = arith.cmpi ne, %28, %29 : vector<1x512xi32>
    %c0_i32_10 = arith.constant 0 : i32
    %31 = vector.broadcast %c0_i32_10 : i32 to vector<1x512xi32>
    %32 = arith.cmpi slt, %28, %31 : vector<1x512xi32>
    %c0_i32_11 = arith.constant 0 : i32
    %33 = arith.cmpi slt, %26, %c0_i32_11 : i32
    %34 = vector.broadcast %33 : i1 to vector<1x512xi1>
    %35 = vector.broadcast %34 : vector<1x512xi1> to vector<1x512xi1>
    %36 = arith.xori %32, %35 : vector<1x512xi1>
    %37 = arith.andi %36, %30 : vector<1x512xi1>
    %38 = vector.broadcast %26 : i32 to vector<1x512xi32>
    %39 = arith.addi %28, %38 : vector<1x512xi32>
    %40 = arith.select %37, %39, %28 : vector<1x512xi1>, vector<1x512xi32>
    %c14_i32 = arith.constant 14 : i32
    %41 = vector.broadcast %c14_i32 : i32 to vector<1x512xi32>
    %42 = arith.cmpi slt, %40, %41 : vector<1x512xi32>
    %cst_12 = arith.constant 0.000000e+00 : f32
    %43 = vector.shape_cast %42 : vector<1x512xi1> to vector<1x512xi1>
    %44 = vector.broadcast %43 : vector<1x512xi1> to vector<4x512xi1>
    %45 = vector.broadcast %cst_12 : f32 to vector<4x512xf32>
    %46 = arith.select %44, %22, %45 : vector<4x512xi1>, vector<4x512xf32>
    %c15_i32 = arith.constant 15 : i32
    %47 = vector.broadcast %c15_i32 : i32 to vector<1x512xi32>
    %48 = arith.cmpi slt, %40, %47 : vector<1x512xi32>
    %cst_13 = arith.constant 0.000000e+00 : f32
    %49 = vector.shape_cast %48 : vector<1x512xi1> to vector<1x512xi1>
    %50 = vector.broadcast %49 : vector<1x512xi1> to vector<4x512xi1>
    %51 = vector.broadcast %cst_13 : f32 to vector<4x512xf32>
    %52 = arith.select %50, %22, %51 : vector<4x512xi1>, vector<4x512xf32>
    %c1_i32_14 = arith.constant 1 : i32
    %53 = vector.broadcast %c1_i32_14 : i32 to vector<1x512xi32>
    %54 = arith.cmpi sge, %40, %53 : vector<1x512xi32>
    %cst_15 = arith.constant 0.000000e+00 : f32
    %55 = vector.shape_cast %54 : vector<1x512xi1> to vector<1x512xi1>
    %56 = vector.broadcast %55 : vector<1x512xi1> to vector<4x512xi1>
    %57 = vector.broadcast %cst_15 : f32 to vector<4x512xf32>
    %58 = arith.select %56, %22, %57 : vector<4x512xi1>, vector<4x512xf32>
    %c2_i32 = arith.constant 2 : i32
    %59 = vector.broadcast %c2_i32 : i32 to vector<1x512xi32>
    %60 = arith.cmpi sge, %40, %59 : vector<1x512xi32>
    %cst_16 = arith.constant 0.000000e+00 : f32
    %61 = vector.shape_cast %60 : vector<1x512xi1> to vector<1x512xi1>
    %62 = vector.broadcast %61 : vector<1x512xi1> to vector<4x512xi1>
    %63 = vector.broadcast %cst_16 : f32 to vector<4x512xf32>
    %64 = arith.select %62, %22, %63 : vector<4x512xi1>, vector<4x512xf32>
    %c0_17 = arith.constant 0 : index
    %c0_18 = arith.constant 0 : index
    %65 = vector.load %arg4[%c0_17, %c0_18] : memref<4x25xf32, #tpu.memory_space<vmem>>, vector<4x25xf32>
    %cst_19 = arith.constant 0.000000e+00 : f32
    %66 = vector.broadcast %cst_19 : f32 to vector<4x512xf32>
    %c34_i32 = arith.constant 34 : i32
    %67 = tpu.dynamic_rotate %46 by %c34_i32 dim 1 : vector<4x512xf32>, i32 -> vector<4x512xf32>
    %68 = vector.extract_strided_slice %65 {offsets = [0, 0], sizes = [4, 1], strides = [1, 1]} : vector<4x25xf32> to vector<4x1xf32>
    %69 = vector.broadcast %68 : vector<4x1xf32> to vector<4x512xf32>
    %70 = arith.mulf %69, %67 : vector<4x512xf32>
    %71 = arith.addf %66, %70 : vector<4x512xf32>
    %c33_i32 = arith.constant 33 : i32
    %72 = tpu.dynamic_rotate %52 by %c33_i32 dim 1 : vector<4x512xf32>, i32 -> vector<4x512xf32>
    %73 = vector.extract_strided_slice %65 {offsets = [0, 1], sizes = [4, 1], strides = [1, 1]} : vector<4x25xf32> to vector<4x1xf32>
    %74 = vector.broadcast %73 : vector<4x1xf32> to vector<4x512xf32>
    %75 = arith.mulf %74, %72 : vector<4x512xf32>
    %76 = arith.addf %71, %75 : vector<4x512xf32>
    %c32_i32 = arith.constant 32 : i32
    %77 = tpu.dynamic_rotate %22 by %c32_i32 dim 1 : vector<4x512xf32>, i32 -> vector<4x512xf32>
    %78 = vector.extract_strided_slice %65 {offsets = [0, 2], sizes = [4, 1], strides = [1, 1]} : vector<4x25xf32> to vector<4x1xf32>
    %79 = vector.broadcast %78 : vector<4x1xf32> to vector<4x512xf32>
    %80 = arith.mulf %79, %77 : vector<4x512xf32>
    %81 = arith.addf %76, %80 : vector<4x512xf32>
    %c31_i32 = arith.constant 31 : i32
    %82 = tpu.dynamic_rotate %58 by %c31_i32 dim 1 : vector<4x512xf32>, i32 -> vector<4x512xf32>
    %83 = vector.extract_strided_slice %65 {offsets = [0, 3], sizes = [4, 1], strides = [1, 1]} : vector<4x25xf32> to vector<4x1xf32>
    %84 = vector.broadcast %83 : vector<4x1xf32> to vector<4x512xf32>
    %85 = arith.mulf %84, %82 : vector<4x512xf32>
    %86 = arith.addf %81, %85 : vector<4x512xf32>
    %c30_i32 = arith.constant 30 : i32
    %87 = tpu.dynamic_rotate %64 by %c30_i32 dim 1 : vector<4x512xf32>, i32 -> vector<4x512xf32>
    %88 = vector.extract_strided_slice %65 {offsets = [0, 4], sizes = [4, 1], strides = [1, 1]} : vector<4x25xf32> to vector<4x1xf32>
    %89 = vector.broadcast %88 : vector<4x1xf32> to vector<4x512xf32>
    %90 = arith.mulf %89, %87 : vector<4x512xf32>
    %91 = arith.addf %86, %90 : vector<4x512xf32>
    %c18_i32 = arith.constant 18 : i32
    %92 = tpu.dynamic_rotate %46 by %c18_i32 dim 1 : vector<4x512xf32>, i32 -> vector<4x512xf32>
    %93 = vector.extract_strided_slice %65 {offsets = [0, 5], sizes = [4, 1], strides = [1, 1]} : vector<4x25xf32> to vector<4x1xf32>
    %94 = vector.broadcast %93 : vector<4x1xf32> to vector<4x512xf32>
    %95 = arith.mulf %94, %92 : vector<4x512xf32>
    %96 = arith.addf %91, %95 : vector<4x512xf32>
    %c17_i32 = arith.constant 17 : i32
    %97 = tpu.dynamic_rotate %52 by %c17_i32 dim 1 : vector<4x512xf32>, i32 -> vector<4x512xf32>
    %98 = vector.extract_strided_slice %65 {offsets = [0, 6], sizes = [4, 1], strides = [1, 1]} : vector<4x25xf32> to vector<4x1xf32>
    %99 = vector.broadcast %98 : vector<4x1xf32> to vector<4x512xf32>
    %100 = arith.mulf %99, %97 : vector<4x512xf32>
    %101 = arith.addf %96, %100 : vector<4x512xf32>
    %c16_i32_20 = arith.constant 16 : i32
    %102 = tpu.dynamic_rotate %22 by %c16_i32_20 dim 1 : vector<4x512xf32>, i32 -> vector<4x512xf32>
    %103 = vector.extract_strided_slice %65 {offsets = [0, 7], sizes = [4, 1], strides = [1, 1]} : vector<4x25xf32> to vector<4x1xf32>
    %104 = vector.broadcast %103 : vector<4x1xf32> to vector<4x512xf32>
    %105 = arith.mulf %104, %102 : vector<4x512xf32>
    %106 = arith.addf %101, %105 : vector<4x512xf32>
    %c15_i32_21 = arith.constant 15 : i32
    %107 = tpu.dynamic_rotate %58 by %c15_i32_21 dim 1 : vector<4x512xf32>, i32 -> vector<4x512xf32>
    %108 = vector.extract_strided_slice %65 {offsets = [0, 8], sizes = [4, 1], strides = [1, 1]} : vector<4x25xf32> to vector<4x1xf32>
    %109 = vector.broadcast %108 : vector<4x1xf32> to vector<4x512xf32>
    %110 = arith.mulf %109, %107 : vector<4x512xf32>
    %111 = arith.addf %106, %110 : vector<4x512xf32>
    %c14_i32_22 = arith.constant 14 : i32
    %112 = tpu.dynamic_rotate %64 by %c14_i32_22 dim 1 : vector<4x512xf32>, i32 -> vector<4x512xf32>
    %113 = vector.extract_strided_slice %65 {offsets = [0, 9], sizes = [4, 1], strides = [1, 1]} : vector<4x25xf32> to vector<4x1xf32>
    %114 = vector.broadcast %113 : vector<4x1xf32> to vector<4x512xf32>
    %115 = arith.mulf %114, %112 : vector<4x512xf32>
    %116 = arith.addf %111, %115 : vector<4x512xf32>
    %c2_i32_23 = arith.constant 2 : i32
    %117 = tpu.dynamic_rotate %46 by %c2_i32_23 dim 1 : vector<4x512xf32>, i32 -> vector<4x512xf32>
    %118 = vector.extract_strided_slice %65 {offsets = [0, 10], sizes = [4, 1], strides = [1, 1]} : vector<4x25xf32> to vector<4x1xf32>
    %119 = vector.broadcast %118 : vector<4x1xf32> to vector<4x512xf32>
    %120 = arith.mulf %119, %117 : vector<4x512xf32>
    %121 = arith.addf %116, %120 : vector<4x512xf32>
    %c1_i32_24 = arith.constant 1 : i32
    %122 = tpu.dynamic_rotate %52 by %c1_i32_24 dim 1 : vector<4x512xf32>, i32 -> vector<4x512xf32>
    %123 = vector.extract_strided_slice %65 {offsets = [0, 11], sizes = [4, 1], strides = [1, 1]} : vector<4x25xf32> to vector<4x1xf32>
    %124 = vector.broadcast %123 : vector<4x1xf32> to vector<4x512xf32>
    %125 = arith.mulf %124, %122 : vector<4x512xf32>
    %126 = arith.addf %121, %125 : vector<4x512xf32>
    %127 = vector.extract_strided_slice %65 {offsets = [0, 12], sizes = [4, 1], strides = [1, 1]} : vector<4x25xf32> to vector<4x1xf32>
    %128 = vector.broadcast %127 : vector<4x1xf32> to vector<4x512xf32>
    %129 = arith.mulf %128, %22 : vector<4x512xf32>
    %130 = arith.addf %126, %129 : vector<4x512xf32>
    %c511_i32 = arith.constant 511 : i32
    %131 = tpu.dynamic_rotate %58 by %c511_i32 dim 1 : vector<4x512xf32>, i32 -> vector<4x512xf32>
    %132 = vector.extract_strided_slice %65 {offsets = [0, 13], sizes = [4, 1], strides = [1, 1]} : vector<4x25xf32> to vector<4x1xf32>
    %133 = vector.broadcast %132 : vector<4x1xf32> to vector<4x512xf32>
    %134 = arith.mulf %133, %131 : vector<4x512xf32>
    %135 = arith.addf %130, %134 : vector<4x512xf32>
    %c510_i32 = arith.constant 510 : i32
    %136 = tpu.dynamic_rotate %64 by %c510_i32 dim 1 : vector<4x512xf32>, i32 -> vector<4x512xf32>
    %137 = vector.extract_strided_slice %65 {offsets = [0, 14], sizes = [4, 1], strides = [1, 1]} : vector<4x25xf32> to vector<4x1xf32>
    %138 = vector.broadcast %137 : vector<4x1xf32> to vector<4x512xf32>
    %139 = arith.mulf %138, %136 : vector<4x512xf32>
    %140 = arith.addf %135, %139 : vector<4x512xf32>
    %c498_i32 = arith.constant 498 : i32
    %141 = tpu.dynamic_rotate %46 by %c498_i32 dim 1 : vector<4x512xf32>, i32 -> vector<4x512xf32>
    %142 = vector.extract_strided_slice %65 {offsets = [0, 15], sizes = [4, 1], strides = [1, 1]} : vector<4x25xf32> to vector<4x1xf32>
    %143 = vector.broadcast %142 : vector<4x1xf32> to vector<4x512xf32>
    %144 = arith.mulf %143, %141 : vector<4x512xf32>
    %145 = arith.addf %140, %144 : vector<4x512xf32>
    %c497_i32 = arith.constant 497 : i32
    %146 = tpu.dynamic_rotate %52 by %c497_i32 dim 1 : vector<4x512xf32>, i32 -> vector<4x512xf32>
    %147 = vector.extract_strided_slice %65 {offsets = [0, 16], sizes = [4, 1], strides = [1, 1]} : vector<4x25xf32> to vector<4x1xf32>
    %148 = vector.broadcast %147 : vector<4x1xf32> to vector<4x512xf32>
    %149 = arith.mulf %148, %146 : vector<4x512xf32>
    %150 = arith.addf %145, %149 : vector<4x512xf32>
    %c496_i32 = arith.constant 496 : i32
    %151 = tpu.dynamic_rotate %22 by %c496_i32 dim 1 : vector<4x512xf32>, i32 -> vector<4x512xf32>
    %152 = vector.extract_strided_slice %65 {offsets = [0, 17], sizes = [4, 1], strides = [1, 1]} : vector<4x25xf32> to vector<4x1xf32>
    %153 = vector.broadcast %152 : vector<4x1xf32> to vector<4x512xf32>
    %154 = arith.mulf %153, %151 : vector<4x512xf32>
    %155 = arith.addf %150, %154 : vector<4x512xf32>
    %c495_i32 = arith.constant 495 : i32
    %156 = tpu.dynamic_rotate %58 by %c495_i32 dim 1 : vector<4x512xf32>, i32 -> vector<4x512xf32>
    %157 = vector.extract_strided_slice %65 {offsets = [0, 18], sizes = [4, 1], strides = [1, 1]} : vector<4x25xf32> to vector<4x1xf32>
    %158 = vector.broadcast %157 : vector<4x1xf32> to vector<4x512xf32>
    %159 = arith.mulf %158, %156 : vector<4x512xf32>
    %160 = arith.addf %155, %159 : vector<4x512xf32>
    %c494_i32 = arith.constant 494 : i32
    %161 = tpu.dynamic_rotate %64 by %c494_i32 dim 1 : vector<4x512xf32>, i32 -> vector<4x512xf32>
    %162 = vector.extract_strided_slice %65 {offsets = [0, 19], sizes = [4, 1], strides = [1, 1]} : vector<4x25xf32> to vector<4x1xf32>
    %163 = vector.broadcast %162 : vector<4x1xf32> to vector<4x512xf32>
    %164 = arith.mulf %163, %161 : vector<4x512xf32>
    %165 = arith.addf %160, %164 : vector<4x512xf32>
    %c482_i32 = arith.constant 482 : i32
    %166 = tpu.dynamic_rotate %46 by %c482_i32 dim 1 : vector<4x512xf32>, i32 -> vector<4x512xf32>
    %167 = vector.extract_strided_slice %65 {offsets = [0, 20], sizes = [4, 1], strides = [1, 1]} : vector<4x25xf32> to vector<4x1xf32>
    %168 = vector.broadcast %167 : vector<4x1xf32> to vector<4x512xf32>
    %169 = arith.mulf %168, %166 : vector<4x512xf32>
    %170 = arith.addf %165, %169 : vector<4x512xf32>
    %c481_i32 = arith.constant 481 : i32
    %171 = tpu.dynamic_rotate %52 by %c481_i32 dim 1 : vector<4x512xf32>, i32 -> vector<4x512xf32>
    %172 = vector.extract_strided_slice %65 {offsets = [0, 21], sizes = [4, 1], strides = [1, 1]} : vector<4x25xf32> to vector<4x1xf32>
    %173 = vector.broadcast %172 : vector<4x1xf32> to vector<4x512xf32>
    %174 = arith.mulf %173, %171 : vector<4x512xf32>
    %175 = arith.addf %170, %174 : vector<4x512xf32>
    %c480_i32 = arith.constant 480 : i32
    %176 = tpu.dynamic_rotate %22 by %c480_i32 dim 1 : vector<4x512xf32>, i32 -> vector<4x512xf32>
    %177 = vector.extract_strided_slice %65 {offsets = [0, 22], sizes = [4, 1], strides = [1, 1]} : vector<4x25xf32> to vector<4x1xf32>
    %178 = vector.broadcast %177 : vector<4x1xf32> to vector<4x512xf32>
    %179 = arith.mulf %178, %176 : vector<4x512xf32>
    %180 = arith.addf %175, %179 : vector<4x512xf32>
    %c479_i32 = arith.constant 479 : i32
    %181 = tpu.dynamic_rotate %58 by %c479_i32 dim 1 : vector<4x512xf32>, i32 -> vector<4x512xf32>
    %182 = vector.extract_strided_slice %65 {offsets = [0, 23], sizes = [4, 1], strides = [1, 1]} : vector<4x25xf32> to vector<4x1xf32>
    %183 = vector.broadcast %182 : vector<4x1xf32> to vector<4x512xf32>
    %184 = arith.mulf %183, %181 : vector<4x512xf32>
    %185 = arith.addf %180, %184 : vector<4x512xf32>
    %c478_i32 = arith.constant 478 : i32
    %186 = tpu.dynamic_rotate %64 by %c478_i32 dim 1 : vector<4x512xf32>, i32 -> vector<4x512xf32>
    %187 = vector.extract_strided_slice %65 {offsets = [0, 24], sizes = [4, 1], strides = [1, 1]} : vector<4x25xf32> to vector<4x1xf32>
    %188 = vector.broadcast %187 : vector<4x1xf32> to vector<4x512xf32>
    %189 = arith.mulf %188, %186 : vector<4x512xf32>
    %190 = arith.addf %185, %189 : vector<4x512xf32>
    %c0_25 = arith.constant 0 : index
    %c0_26 = arith.constant 0 : index
    %191 = vector.load %arg5[%c0_25, %c0_26] : memref<4x1xf32, #tpu.memory_space<vmem>>, vector<4x1xf32>
    %192 = vector.broadcast %191 : vector<4x1xf32> to vector<4x512xf32>
    %193 = arith.addf %190, %192 : vector<4x512xf32>
    %194 = arith.negf %193 : vector<4x512xf32>
    %195 = math.exp %194 : vector<4x512xf32>
    %cst_27 = arith.constant 1.000000e+00 : f32
    %196 = vector.broadcast %cst_27 : f32 to vector<4x512xf32>
    %197 = arith.addf %196, %195 : vector<4x512xf32>
    %198 = arith.divf %196, %197 : vector<4x512xf32>
    %199 = arith.mulf %193, %198 : vector<4x512xf32>
    %200 = vector.extract_strided_slice %22 {offsets = [0, 128], sizes = [4, 256], strides = [1, 1]} : vector<4x512xf32> to vector<4x256xf32>
    %201 = vector.extract_strided_slice %199 {offsets = [0, 128], sizes = [4, 256], strides = [1, 1]} : vector<4x512xf32> to vector<4x256xf32>
    %202 = vector.extract_strided_slice %200 {offsets = [0, 0], sizes = [2, 256], strides = [1, 1]} : vector<4x256xf32> to vector<2x256xf32>
    %c0_28 = arith.constant 0 : index
    %c0_29 = arith.constant 0 : index
    %c0_30 = arith.constant 0 : index
    %203 = vector.load %arg6[%c0_28, %c0_29, %c0_30] : memref<1x8x256xf32, #tpu.memory_space<vmem>>, vector<1x2x256xf32>
    %204 = vector.shape_cast %203 : vector<1x2x256xf32> to vector<2x256xf32>
    %205 = vector.shape_cast %202 : vector<2x256xf32> to vector<1x2x256xf32>
    tpu.vector_store %arg6[%c0_28, %c0_29, %c0_30], %205 {strides = array<i32>} : memref<1x8x256xf32, #tpu.memory_space<vmem>>, vector<1x2x256xf32>,
    %206 = vector.extract_strided_slice %201 {offsets = [0, 0], sizes = [2, 256], strides = [1, 1]} : vector<4x256xf32> to vector<2x256xf32>
    %c0_31 = arith.constant 0 : index
    %c2 = arith.constant 2 : index
    %c0_32 = arith.constant 0 : index
    %207 = vector.load %arg6[%c0_31, %c2, %c0_32] : memref<1x8x256xf32, #tpu.memory_space<vmem>>, vector<1x2x256xf32>
    %208 = vector.shape_cast %207 : vector<1x2x256xf32> to vector<2x256xf32>
    %209 = vector.shape_cast %206 : vector<2x256xf32> to vector<1x2x256xf32>
    tpu.vector_store %arg6[%c0_31, %c2, %c0_32], %209 {strides = array<i32>} : memref<1x8x256xf32, #tpu.memory_space<vmem>>, vector<1x2x256xf32>,
    %210 = vector.extract_strided_slice %200 {offsets = [2, 0], sizes = [2, 256], strides = [1, 1]} : vector<4x256xf32> to vector<2x256xf32>
    %c0_33 = arith.constant 0 : index
    %c4 = arith.constant 4 : index
    %c0_34 = arith.constant 0 : index
    %211 = vector.load %arg6[%c0_33, %c4, %c0_34] : memref<1x8x256xf32, #tpu.memory_space<vmem>>, vector<1x2x256xf32>
    %212 = vector.shape_cast %211 : vector<1x2x256xf32> to vector<2x256xf32>
    %213 = vector.shape_cast %210 : vector<2x256xf32> to vector<1x2x256xf32>
    tpu.vector_store %arg6[%c0_33, %c4, %c0_34], %213 {strides = array<i32>} : memref<1x8x256xf32, #tpu.memory_space<vmem>>, vector<1x2x256xf32>,
    %214 = vector.extract_strided_slice %201 {offsets = [2, 0], sizes = [2, 256], strides = [1, 1]} : vector<4x256xf32> to vector<2x256xf32>
    %c0_35 = arith.constant 0 : index
    %c6 = arith.constant 6 : index
    %c0_36 = arith.constant 0 : index
    %215 = vector.load %arg6[%c0_35, %c6, %c0_36] : memref<1x8x256xf32, #tpu.memory_space<vmem>>, vector<1x2x256xf32>
    %216 = vector.shape_cast %215 : vector<1x2x256xf32> to vector<2x256xf32>
    %217 = vector.shape_cast %214 : vector<2x256xf32> to vector<1x2x256xf32>
    tpu.vector_store %arg6[%c0_35, %c6, %c0_36], %217 {strides = array<i32>} : memref<1x8x256xf32, #tpu.memory_space<vmem>>, vector<1x2x256xf32>,
    return
  }
  func.func @transform_0(%arg0: i32) -> (i32, i32, i32) {
    %c0_i32 = arith.constant 0 : i32
    %c0_i32_0 = arith.constant 0 : i32
    %c0_i32_1 = arith.constant 0 : i32
    return %arg0, %c0_i32, %c0_i32_0 : i32, i32, i32
  }
  func.func @transform_1(%arg0: i32) -> (i32, i32) {
    %c0_i32 = arith.constant 0 : i32
    %c0_i32_0 = arith.constant 0 : i32
    %c0_i32_1 = arith.constant 0 : i32
    return %c0_i32, %c0_i32_0 : i32, i32
  }
  func.func @transform_2(%arg0: i32) -> (i32, i32) {
    %c0_i32 = arith.constant 0 : i32
    %c0_i32_0 = arith.constant 0 : i32
    %c0_i32_1 = arith.constant 0 : i32
    return %c0_i32, %c0_i32_0 : i32, i32
  }
  func.func @transform_3(%arg0: i32) -> (i32, i32) {
    %c0_i32 = arith.constant 0 : i32
    %c0_i32_0 = arith.constant 0 : i32
    %c0_i32_1 = arith.constant 0 : i32
    return %c0_i32, %c0_i32_0 : i32, i32
  }
  func.func @transform_4(%arg0: i32) -> (i32, i32) {
    %c0_i32 = arith.constant 0 : i32
    %c0_i32_0 = arith.constant 0 : i32
    %c0_i32_1 = arith.constant 0 : i32
    return %c0_i32, %c0_i32_0 : i32, i32
  }
  func.func @transform_5(%arg0: i32) -> (i32, i32, i32) {
    %c0_i32 = arith.constant 0 : i32
    %c0_i32_0 = arith.constant 0 : i32
    %c0_i32_1 = arith.constant 0 : i32
    return %arg0, %c0_i32, %c0_i32_0 : i32, i32, i32
  }
}

</mosaic_0001>

<llo_original>
// kernel: tpu_custom_call.1
$region0: #{tpu_custom_call.1}
  #allocation0 [shape = 'u32[]', space=smem, size = 0x4, offset = 0x4, fixed_abs, tag = 'smem constant byte address 0x4 - core index']
  #allocation1 [shape = 'u32[144,128]{1,0:T(1,128)}', space=vmem, size = 0x12000, scoped, tag = 'internal scratch']
  %s0 = inlined_call_operand.hbm [shape: f32[2,8,512], index: 0, kind: input, shape index: {}]
  %s1 = inlined_call_operand.vmem [shape: f32[4,8], index: 1, kind: input, shape index: {}]
  %s2 = inlined_call_operand.vmem [shape: f32[4,1], index: 2, kind: input, shape index: {}]
  %s3 = inlined_call_operand.vmem [shape: f32[4,25], index: 3, kind: input, shape index: {}]
  %s4 = inlined_call_operand.vmem [shape: f32[4,1], index: 4, kind: input, shape index: {}]
  %s5 = inlined_call_operand.hbm [shape: f32[2,8,256], index: 5, kind: output, shape index: {}]
  %s6 = sld [smem:[#allocation0]]
  $region57: #{tpu_custom_call.1} parent=0
    _
  %s8 = ssub.s32 1, %s6
  %s9 = scalar_select 0, %s8, %s6
  $region1: #{tpu_custom_call.1} parent=0
    #allocation2 [shape = 'u8[32768]{0}', space=vmem, size = 0x8000, scoped, tag = 'input window, operand 0']
    #allocation3 [shape = 's32[2]{0}', space=sflag, size = 0x8, scoped, tag = 'scoped memory for tpu_custom_call.1']
    #allocation4 [shape = 's32[2]{0}', space=sflag, size = 0x8, scoped, tag = 'scoped memory for tpu_custom_call.1']
    #allocation5 [shape = 'u8[16384]{0}', space=vmem, size = 0x4000, scoped, tag = 'output window, operand 0']
    %10 = vsyncpa [#allocation3], 0
    %s11 = scalar_lea.sflag [#allocation3], 1
    %12 = vsyncpa %s11, 0
    %13 = vsyncpa [#allocation4], 0
    %s14 = scalar_lea.sflag [#allocation4], 1
    %15 = vsyncpa %s14, 0
    loop: start=0, step=1, limit=4
    $region2: #{tpu_custom_call.1} parent=1 // loop_pre_header
      _
    $region3: #{tpu_custom_call.1} parent=1 // loop_header
      %s17 = sphi 0, %s21
      %p18 = scmp.ge.s32.totalorder %s17, 4
      %s27 = sphi 0, %s29
      %s30 = sphi 0, %s27
      %s31 = sphi 0, %s30
      %s47 = sphi 0, %s31
      %s51 = sphi 0, %s51
      %s53 = sphi 0, %s51
      %s54 = sphi 0, %s53
      %s68 = sphi 0, %s54
      %s72 = sphi 0, %s72
      %s74 = sphi 0, %s72
      %s75 = sphi 0, %s74
      %s89 = sphi 0, %s75
      %s93 = sphi 0, %s93
      %s95 = sphi 0, %s93
      %s96 = sphi 0, %s95
      %s110 = sphi 0, %s96
      %s114 = sphi 0, %s114
      %s116 = sphi 0, %s114
      %s117 = sphi 0, %s116
      %s131 = sphi 0, %s117
      %s137 = sphi 0, %s139
      %s140 = sphi 0, %s137
      %s141 = sphi 0, %s140
      %s157 = sphi 0, %s141
    $region4: #{tpu_custom_call.1} parent=1 // loop_header_branch
      %20 = sbr.rel (%p18) target = $region8
    $region5: #{tpu_custom_call.1} parent=1 // loop_body
      %s22 = ssub.s32 %s17, 1
      %s23 = ssub.s32 %s17, 2
      %s24 = sadd.s32 %s17, 1
      %s25 = ssub.s32 %s17, %s24
      %p26 = scmp.eq.s32.totalorder %s25, 0
      %s28 = sadd.s32 %s27, 1
      %s29 = scalar_select %p26, %s27, %s28
      %p32 = pneg %p26
      %p33 = scmp.eq.s32.totalorder %s17, 1
      %p34 = por %p32, %p33
      %p35 = scmp.ne.s32.totalorder %s27, %s30
      %p36 = scmp.eq.s32.totalorder %s17, 0
      %p37 = por %p35, %p36
      %p38 = scmp.ne.s32.totalorder %s27, %s30
      %p39 = scmp.eq.s32.totalorder %s22, 1
      %p40 = por %p38, %p39
      %p41 = scmp.ne.s32.totalorder %s30, %s31
      %p42 = scmp.eq.s32.totalorder %s22, 0
      %p43 = por %p41, %p42
      %p44 = scmp.ne.s32.totalorder %s30, %s31
      %p45 = scmp.eq.s32.totalorder %s23, 1
      %p46 = por %p44, %p45
      %p48 = scmp.ne.s32.totalorder %s31, %s47
      %p49 = scmp.eq.s32.totalorder %s23, 0
      %p50 = por %p48, %p49
      %s52 = sadd.s32 %s51, 1
      %p55 = scmp.eq.s32.totalorder %s17, 1
      %p56 = scmp.ne.s32.totalorder %s51, %s53
      %p57 = scmp.eq.s32.totalorder %s17, 0
      %p58 = por %p56, %p57
      %p59 = scmp.ne.s32.totalorder %s51, %s53
      %p60 = scmp.eq.s32.totalorder %s22, 1
      %p61 = por %p59, %p60
      %p62 = scmp.ne.s32.totalorder %s53, %s54
      %p63 = scmp.eq.s32.totalorder %s22, 0
      %p64 = por %p62, %p63
      %p65 = scmp.ne.s32.totalorder %s53, %s54
      %p66 = scmp.eq.s32.totalorder %s23, 1
      %p67 = por %p65, %p66
      %p69 = scmp.ne.s32.totalorder %s54, %s68
      %p70 = scmp.eq.s32.totalorder %s23, 0
      %p71 = por %p69, %p70
      %s73 = sadd.s32 %s72, 1
      %p76 = scmp.eq.s32.totalorder %s17, 1
      %p77 = scmp.ne.s32.totalorder %s72, %s74
      %p78 = scmp.eq.s32.totalorder %s17, 0
      %p79 = por %p77, %p78
      %p80 = scmp.ne.s32.totalorder %s72, %s74
      %p81 = scmp.eq.s32.totalorder %s22, 1
      %p82 = por %p80, %p81
      %p83 = scmp.ne.s32.totalorder %s74, %s75
      %p84 = scmp.eq.s32.totalorder %s22, 0
      %p85 = por %p83, %p84
      %p86 = scmp.ne.s32.totalorder %s74, %s75
      %p87 = scmp.eq.s32.totalorder %s23, 1
      %p88 = por %p86, %p87
      %p90 = scmp.ne.s32.totalorder %s75, %s89
      %p91 = scmp.eq.s32.totalorder %s23, 0
      %p92 = por %p90, %p91
      %s94 = sadd.s32 %s93, 1
      %p97 = scmp.eq.s32.totalorder %s17, 1
      %p98 = scmp.ne.s32.totalorder %s93, %s95
      %p99 = scmp.eq.s32.totalorder %s17, 0
      %p100 = por %p98, %p99
      %p101 = scmp.ne.s32.totalorder %s93, %s95
      %p102 = scmp.eq.s32.totalorder %s22, 1
      %p103 = por %p101, %p102
      %p104 = scmp.ne.s32.totalorder %s95, %s96
      %p105 = scmp.eq.s32.totalorder %s22, 0
      %p106 = por %p104, %p105
      %p107 = scmp.ne.s32.totalorder %s95, %s96
      %p108 = scmp.eq.s32.totalorder %s23, 1
      %p109 = por %p107, %p108
      %p111 = scmp.ne.s32.totalorder %s96, %s110
      %p112 = scmp.eq.s32.totalorder %s23, 0
      %p113 = por %p111, %p112
      %s115 = sadd.s32 %s114, 1
      %p118 = scmp.eq.s32.totalorder %s17, 1
      %p119 = scmp.ne.s32.totalorder %s114, %s116
      %p120 = scmp.eq.s32.totalorder %s17, 0
      %p121 = por %p119, %p120
      %p122 = scmp.ne.s32.totalorder %s114, %s116
      %p123 = scmp.eq.s32.totalorder %s22, 1
      %p124 = por %p122, %p123
      %p125 = scmp.ne.s32.totalorder %s116, %s117
      %p126 = scmp.eq.s32.totalorder %s22, 0
      %p127 = por %p125, %p126
      %p128 = scmp.ne.s32.totalorder %s116, %s117
      %p129 = scmp.eq.s32.totalorder %s23, 1
      %p130 = por %p128, %p129
      %p132 = scmp.ne.s32.totalorder %s117, %s131
      %p133 = scmp.eq.s32.totalorder %s23, 0
      %p134 = por %p132, %p133
      %s135 = ssub.s32 %s17, %s24
      %p136 = scmp.eq.s32.totalorder %s135, 0
      %s138 = sadd.s32 %s137, 1
      %s139 = scalar_select %p136, %s137, %s138
      %p142 = pneg %p136
      %p143 = scmp.eq.s32.totalorder %s17, 1
      %p144 = por %p142, %p143
      %p145 = scmp.ne.s32.totalorder %s137, %s140
      %p146 = scmp.eq.s32.totalorder %s17, 0
      %p147 = por %p145, %p146
      %p148 = scmp.ne.s32.totalorder %s137, %s140
      %p149 = scmp.eq.s32.totalorder %s22, 1
      %p150 = por %p148, %p149
      %p151 = scmp.ne.s32.totalorder %s140, %s141
      %p152 = scmp.eq.s32.totalorder %s22, 0
      %p153 = por %p151, %p152
      %p154 = scmp.ne.s32.totalorder %s140, %s141
      %p155 = scmp.eq.s32.totalorder %s23, 1
      %p156 = por %p154, %p155
      %p158 = scmp.ne.s32.totalorder %s141, %s157
      %p159 = scmp.eq.s32.totalorder %s23, 0
      %p160 = por %p158, %p159
      %p161 = scmp.le.s32.totalorder 1, %s17
      %p162 = scmp.lt.s32.totalorder %s17, 3
      %p163 = pnand %p161, %p162
      %p164 = pneg %p163
      // Predicated region
      $region9: #{tpu_custom_call.1} parent=5 // pred_check
        _
      $region10: #{tpu_custom_call.1} parent=5 // pred_check_branch
        %166 = sbr.rel (%p163) target = $region12
      $region11: #{tpu_custom_call.1} parent=5 // pred_region
        %s167 = ssub.s32 %s17, 1
        // Predicated region
        $region13: #{tpu_custom_call.1} parent=11 // pred_check
          %p168 = pneg %p64
        $region14: #{tpu_custom_call.1} parent=11 // pred_check_branch
          %170 = sbr.rel (%p168) target = $region16
        $region15: #{tpu_custom_call.1} parent=11 // pred_region
          _
        $region16: #{tpu_custom_call.1} parent=11 // pred_fallthru
          _
        // Predicated region
        $region17: #{tpu_custom_call.1} parent=11 // pred_check
          %p171 = pneg %p85
        $region18: #{tpu_custom_call.1} parent=11 // pred_check_branch
          %173 = sbr.rel (%p171) target = $region20
        $region19: #{tpu_custom_call.1} parent=11 // pred_region
          _
        $region20: #{tpu_custom_call.1} parent=11 // pred_fallthru
          _
        // Predicated region
        $region21: #{tpu_custom_call.1} parent=11 // pred_check
          %p174 = pneg %p106
        $region22: #{tpu_custom_call.1} parent=11 // pred_check_branch
          %176 = sbr.rel (%p174) target = $region24
        $region23: #{tpu_custom_call.1} parent=11 // pred_region
          _
        $region24: #{tpu_custom_call.1} parent=11 // pred_fallthru
          _
        // Predicated region
        $region25: #{tpu_custom_call.1} parent=11 // pred_check
          %p177 = pneg %p127
        $region26: #{tpu_custom_call.1} parent=11 // pred_check_branch
          %179 = sbr.rel (%p177) target = $region28
        $region27: #{tpu_custom_call.1} parent=11 // pred_region
          _
        $region28: #{tpu_custom_call.1} parent=11 // pred_fallthru
          _
      $region12: #{tpu_custom_call.1} parent=5 // pred_fallthru
        _
      %p180 = scmp.lt.s32.totalorder %s17, 2
      // Predicated region
      $region29: #{tpu_custom_call.1} parent=5 // pred_check
        %p181 = pneg %p180
      $region30: #{tpu_custom_call.1} parent=5 // pred_check_branch
        %183 = sbr.rel (%p181) target = $region32
      $region31: #{tpu_custom_call.1} parent=5 // pred_region
        // Predicated region
        $region33: #{tpu_custom_call.1} parent=31 // pred_check
          %p184 = pneg %p37
        $region34: #{tpu_custom_call.1} parent=31 // pred_check_branch
          %186 = sbr.rel (%p184) target = $region36
        $region35: #{tpu_custom_call.1} parent=31 // pred_region
          %s187 = sand.u32 %s27, 1
          %s188 = scalar_lea.sflag [#allocation3], %s187
          %s189 = sand.u32 %s27, 1
          %s190 = smul.addr %s189, 32
          %s191 = scalar_lea.vmem [#allocation2], %s190
          %s193 = ssub.s32 512, 512
          %194 = vsyncadd %s188, %s193
          %s195 = smul.addr %s17, 4
          %s196 = smul.addr %s195, 128
          %s197 = scalar_lea.hbm %s0, %s196
          %s199 = sshll.u32 %s191, 4
          %s200 = int_to_ptr.vmem [resolvable:$true] %s199
          %202 = dma.hbm_to_vmem [thread:$0]  %s197, 512, %s200, %s188
        $region36: #{tpu_custom_call.1} parent=31 // pred_fallthru
          _
      $region32: #{tpu_custom_call.1} parent=5 // pred_fallthru
        _
      %p203 = scmp.le.s32.totalorder 1, %s17
      %p204 = scmp.lt.s32.totalorder %s17, 3
      %p205 = pnand %p203, %p204
      %p206 = pneg %p205
      // Predicated region
      $region37: #{tpu_custom_call.1} parent=5 // pred_check
        _
      $region38: #{tpu_custom_call.1} parent=5 // pred_check_branch
        %208 = sbr.rel (%p205) target = $region40
      $region39: #{tpu_custom_call.1} parent=5 // pred_region
        %s209 = ssub.s32 %s17, 1
        %s210 = sand.u32 %s30, 1
        %s211 = scalar_lea.sflag [#allocation3], %s210
        %s212 = sand.u32 %s30, 1
        %s213 = smul.addr %s212, 32
        %s214 = scalar_lea.vmem [#allocation2], %s213
        // Predicated region
        $region41: #{tpu_custom_call.1} parent=39 // pred_check
          %p215 = pneg %p43
        $region42: #{tpu_custom_call.1} parent=39 // pred_check_branch
          %217 = sbr.rel (%p215) target = $region44
        $region43: #{tpu_custom_call.1} parent=39 // pred_region
          %218 = dma.done %s211, 512
        $region44: #{tpu_custom_call.1} parent=39 // pred_fallthru
          _
        %s219 = sand.u32 %s30, 1
        %s220 = scalar_lea.sflag [#allocation3], %s219
        %s221 = sand.u32 %s30, 1
        %s222 = smul.addr %s221, 32
        %s223 = scalar_lea.vmem [#allocation2], %s222
        %p224 = pneg %p43
        %p225 = pneg %p40
        %p226 = pneg %p64
        %p227 = pneg %p61
        %p228 = pneg %p85
        %p229 = pneg %p82
        %p230 = pneg %p106
        %p231 = pneg %p103
        %p232 = pneg %p127
        %p233 = pneg %p124
        %p234 = pneg %p153
        %p235 = pneg %p150
        %s236 = sand.u32 %s140, 1
        %s237 = scalar_lea.sflag [#allocation4], %s236
        %s238 = sand.u32 %s140, 1
        %s239 = smul.addr %s238, 16
        %s240 = scalar_lea.vmem [#allocation5], %s239
        %v241 = vld [vmem:[%s214] sm:$0xff]
        %v242 = vld [vmem:[%s214 + $0x8] sm:$0xff]
        %v243 = vld [vmem:[%s214 + $0x10] sm:$0xff]
        %v244 = vld [vmem:[%s214 + $0x18] sm:$0xff]
        %v245 = vld [vmem:[%s1] sm:$0xf]
        %v246 = vld [vmem:[%s2] sm:$0xf]
        %248 = vset.pattern.permute.xlu0 0
        %249 = vperm.xlu0 %248, %v246
        %v250 = vpop.permute.xlu0 %249
        %vm252 = vcmask 64512
        %v254 = vsel %vm252, %v245, 0
        %256 = vmatprep.subr.mxu0 %v242
        %257 = vmatpush1.msra.mxu0 %v241
        %258 = vmatprep.subr.mxu0 0.0
        %259 = vmatpush1.msra.mxu0 0.0
        %260 = vmatprep.subr.mxu0 0.0
        %261 = vmatpush1.msra.mxu0 0.0
        %262 = vmatprep.subr.mxu0 0.0
        %263 = vmatpush1.msra.mxu0 0.0
        %264 = vmatprep.subr.mxu0 0.0
        %265 = vmatpush1.msra.mxu0 0.0
        %266 = vmatprep.subr.mxu0 0.0
        %267 = vmatpush1.msra.mxu0 0.0
        %268 = vmatprep.subr.mxu0 0.0
        %269 = vmatpush1.msra.mxu0 0.0
        %270 = vmatprep.subr.mxu0 0.0
        %271 = vmatpush1.msra.mxu0 0.0
        %272 = vmatprep.subr.mxu0 0.0
        %273 = vmatpush1.msra.mxu0 0.0
        %274 = vmatprep.subr.mxu0 0.0
        %275 = vmatpush1.msra.mxu0 0.0
        %276 = vmatprep.subr.mxu0 0.0
        %277 = vmatpush1.msra.mxu0 0.0
        %278 = vmatprep.subr.mxu0 0.0
        %279 = vmatpush1.msra.mxu0 0.0
        %280 = vmatprep.subr.mxu0 0.0
        %281 = vmatpush1.msra.mxu0 0.0
        %282 = vmatprep.subr.mxu0 0.0
        %283 = vmatpush1.msra.mxu0 0.0
        %284 = vmatprep.subr.mxu0 0.0
        %285 = vmatpush1.msra.mxu0 0.0
        %286 = vmatprep.subr.mxu0 0.0
        %287 = vmatpush1.msra.mxu0 0.0
        %288 = vmatprep.subr.mxu0 0.0
        %289 = vmatpush1.msra.mxu0 0.0
        %290 = vmatprep.subr.mxu0 0.0
        %291 = vmatpush1.msra.mxu0 0.0
        %292 = vmatprep.subr.mxu0 0.0
        %293 = vmatpush1.msra.mxu0 0.0
        %294 = vmatprep.subr.mxu0 0.0
        %295 = vmatpush1.msra.mxu0 0.0
        %296 = vmatprep.subr.mxu0 0.0
        %297 = vmatpush1.msra.mxu0 0.0
        %298 = vmatprep.subr.mxu0 0.0
        %299 = vmatpush1.msra.mxu0 0.0
        %300 = vmatprep.subr.mxu0 0.0
        %301 = vmatpush1.msra.mxu0 0.0
        %302 = vmatprep.subr.mxu0 0.0
        %303 = vmatpush1.msra.mxu0 0.0
        %304 = vmatprep.subr.mxu0 0.0
        %305 = vmatpush1.msra.mxu0 0.0
        %306 = vmatprep.subr.mxu0 0.0
        %307 = vmatpush1.msra.mxu0 0.0
        %308 = vmatprep.subr.mxu0 0.0
        %309 = vmatpush1.msra.mxu0 0.0
        %310 = vmatprep.subr.mxu0 0.0
        %311 = vmatpush1.msra.mxu0 0.0
        %312 = vmatprep.subr.mxu0 0.0
        %313 = vmatpush1.msra.mxu0 0.0
        %314 = vmatprep.subr.mxu0 0.0
        %315 = vmatpush1.msra.mxu0 0.0
        %316 = vmatprep.subr.mxu0 0.0
        %317 = vmatpush1.msra.mxu0 0.0
        %318 = vmatprep.subr.mxu0 0.0
        %319 = vmatpush1.msra.mxu0 0.0
        %320 = vmatprep.mubr.f32.mxu0 0.0
        %321 = vmatmul.mubr.f32.gmra.mrb[0].mxu0 %v254
        %v322 = vpop.f32.mrb[0].mxu0
        %v323 = vadd.f32 %v250, %v322
        %v324 = vpop.f32.mrb[0].mxu0
        %v325 = vadd.f32 %v250, %v324
        %326 = vdwg.mxu0
        %327 = vmatprep.subr.mxu0 %v244
        %328 = vmatpush1.msra.mxu0 %v243
        %329 = vmatprep.subr.mxu0 0.0
        %330 = vmatpush1.msra.mxu0 0.0
        %331 = vmatprep.subr.mxu0 0.0
        %332 = vmatpush1.msra.mxu0 0.0
        %333 = vmatprep.subr.mxu0 0.0
        %334 = vmatpush1.msra.mxu0 0.0
        %335 = vmatprep.subr.mxu0 0.0
        %336 = vmatpush1.msra.mxu0 0.0
        %337 = vmatprep.subr.mxu0 0.0
        %338 = vmatpush1.msra.mxu0 0.0
        %339 = vmatprep.subr.mxu0 0.0
        %340 = vmatpush1.msra.mxu0 0.0
        %341 = vmatprep.subr.mxu0 0.0
        %342 = vmatpush1.msra.mxu0 0.0
        %343 = vmatprep.subr.mxu0 0.0
        %344 = vmatpush1.msra.mxu0 0.0
        %345 = vmatprep.subr.mxu0 0.0
        %346 = vmatpush1.msra.mxu0 0.0
        %347 = vmatprep.subr.mxu0 0.0
        %348 = vmatpush1.msra.mxu0 0.0
        %349 = vmatprep.subr.mxu0 0.0
        %350 = vmatpush1.msra.mxu0 0.0
        %351 = vmatprep.subr.mxu0 0.0
        %352 = vmatpush1.msra.mxu0 0.0
        %353 = vmatprep.subr.mxu0 0.0
        %354 = vmatpush1.msra.mxu0 0.0
        %355 = vmatprep.subr.mxu0 0.0
        %356 = vmatpush1.msra.mxu0 0.0
        %357 = vmatprep.subr.mxu0 0.0
        %358 = vmatpush1.msra.mxu0 0.0
        %359 = vmatprep.subr.mxu0 0.0
        %360 = vmatpush1.msra.mxu0 0.0
        %361 = vmatprep.subr.mxu0 0.0
        %362 = vmatpush1.msra.mxu0 0.0
        %363 = vmatprep.subr.mxu0 0.0
        %364 = vmatpush1.msra.mxu0 0.0
        %365 = vmatprep.subr.mxu0 0.0
        %366 = vmatpush1.msra.mxu0 0.0
        %367 = vmatprep.subr.mxu0 0.0
        %368 = vmatpush1.msra.mxu0 0.0
        %369 = vmatprep.subr.mxu0 0.0
        %370 = vmatpush1.msra.mxu0 0.0
        %371 = vmatprep.subr.mxu0 0.0
        %372 = vmatpush1.msra.mxu0 0.0
        %373 = vmatprep.subr.mxu0 0.0
        %374 = vmatpush1.msra.mxu0 0.0
        %375 = vmatprep.subr.mxu0 0.0
        %376 = vmatpush1.msra.mxu0 0.0
        %377 = vmatprep.subr.mxu0 0.0
        %378 = vmatpush1.msra.mxu0 0.0
        %379 = vmatprep.subr.mxu0 0.0
        %380 = vmatpush1.msra.mxu0 0.0
        %381 = vmatprep.subr.mxu0 0.0
        %382 = vmatpush1.msra.mxu0 0.0
        %383 = vmatprep.subr.mxu0 0.0
        %384 = vmatpush1.msra.mxu0 0.0
        %385 = vmatprep.subr.mxu0 0.0
        %386 = vmatpush1.msra.mxu0 0.0
        %387 = vmatprep.subr.mxu0 0.0
        %388 = vmatpush1.msra.mxu0 0.0
        %389 = vmatprep.subr.mxu0 0.0
        %390 = vmatpush1.msra.mxu0 0.0
        %391 = vmatprep.mubr.f32.mxu0 0.0
        %392 = vmatmul.mubr.f32.gmra.mrb[0].mxu0 %v254
        %v393 = vpop.f32.mrb[0].mxu0
        %v394 = vadd.f32 %v250, %v393
        %v395 = vpop.f32.mrb[0].mxu0
        %v396 = vadd.f32 %v250, %v395
        %397 = vdwg.mxu0
        %v398 = vxor.u32 %v323, 2147483648
        %v399 = vxor.u32 %v325, 2147483648
        %v400 = vxor.u32 %v394, 2147483648
        %v401 = vxor.u32 %v396, 2147483648
        %v402 = vmul.f32 %v398, 1.442695
        %v403 = vpow.pop %v402
        %v404 = vmul.f32 %v399, 1.442695
        %v405 = vpow.pop %v404
        %v406 = vmul.f32 %v400, 1.442695
        %v407 = vpow.pop %v406
        %v408 = vmul.f32 %v401, 1.442695
        %v409 = vpow.pop %v408
        %v410 = vadd.f32 %v403, 1.0
        %v411 = vadd.f32 %v405, 1.0
        %v412 = vadd.f32 %v407, 1.0
        %v413 = vadd.f32 %v409, 1.0
        %v414 = vrcp.pop %v410
        %v415 = vmul.f32 1.0, %v414
        %v416 = vrcp.pop %v411
        %v417 = vmul.f32 1.0, %v416
        %v418 = vrcp.pop %v412
        %v419 = vmul.f32 1.0, %v418
        %v420 = vrcp.pop %v413
        %v421 = vmul.f32 1.0, %v420
        %v422 = vmul.f32 %v323, %v415
        %v423 = vmul.f32 %v325, %v417
        %v424 = vmul.f32 %v394, %v419
        %v425 = vmul.f32 %v396, %v421
        %v426 = vlaneseq
        %v427 = vand.u32 %v426, 127
        %v428 = vadd.s32 %v427, 128
        %v429 = vadd.s32 %v427, 256
        %v430 = vadd.s32 %v427, 384
        %vm431 = vcmp.ge.s32.totalorder %v427, 128
        %vm432 = vcmp.ge.s32.totalorder %v428, 128
        %vm433 = vcmp.ge.s32.totalorder %v429, 128
        %vm434 = vcmp.ge.s32.totalorder %v430, 128
        %vm435 = vcmp.lt.s32.totalorder %v427, 384
        %vm436 = vcmp.lt.s32.totalorder %v428, 384
        %vm437 = vcmp.lt.s32.totalorder %v429, 384
        %vm438 = vcmp.lt.s32.totalorder %v430, 384
        %vm439 = vmand %vm431, %vm435
        %vm440 = vmand %vm432, %vm436
        %vm441 = vmand %vm433, %vm437
        %vm442 = vmand %vm434, %vm438
        %v443 = vsel %vm439, 1, 0
        %v444 = vsel %vm440, 1, 0
        %v445 = vsel %vm441, 1, 0
        %v446 = vsel %vm442, 1, 0
        %vm447 = vcmp.eq.s32.totalorder %v443, 1
        %vm448 = vcmp.eq.s32.totalorder %v444, 1
        %vm449 = vcmp.eq.s32.totalorder %v445, 1
        %vm450 = vcmp.eq.s32.totalorder %v446, 1
        %v451 = vsel %vm447, %v422, 0.0
        %v452 = vsel %vm448, %v423, 0.0
        %v453 = vsel %vm449, %v424, 0.0
        %v454 = vsel %vm450, %v425, 0.0
        %v455 = vsub.s32 %v427, 128
        %v456 = vsub.s32 %v429, 128
        %v457 = vsub.s32 %v430, 128
        %vm458 = vcmp.lt.s32.totalorder %v455, 0
        %v459 = vsub.s32 0, %v455
        %v460 = vsel %vm458, %v459, %v455
        %v461 = vshrl.u32 %v460, 4
        %v462 = vand.u32 %v460, 15
        %v463 = vsub.s32 0, %v462
        %v464 = vsel %vm458, %v463, %v462
        %vm465 = vcmp.lt.s32.totalorder %v427, 0
        %v466 = vsub.s32 0, %v427
        %v467 = vsel %vm465, %v466, %v427
        %v468 = vshrl.u32 %v467, 4
        %v469 = vand.u32 %v467, 15
        %v470 = vsub.s32 0, %v469
        %v471 = vsel %vm465, %v470, %v469
        %vm472 = vcmp.lt.s32.totalorder %v456, 0
        %v473 = vsub.s32 0, %v456
        %v474 = vsel %vm472, %v473, %v456
        %v475 = vshrl.u32 %v474, 4
        %v476 = vand.u32 %v474, 15
        %v477 = vsub.s32 0, %v476
        %v478 = vsel %vm472, %v477, %v476
        %vm479 = vcmp.lt.s32.totalorder %v457, 0
        %v480 = vsub.s32 0, %v457
        %v481 = vsel %vm479, %v480, %v457
        %v482 = vshrl.u32 %v481, 4
        %v483 = vand.u32 %v481, 15
        %v484 = vsub.s32 0, %v483
        %v485 = vsel %vm479, %v484, %v483
        %vm486 = vcmp.ne.s32.totalorder %v464, 0
        %vm487 = vcmp.ne.s32.totalorder %v471, 0
        %vm488 = vcmp.ne.s32.totalorder %v478, 0
        %vm489 = vcmp.ne.s32.totalorder %v485, 0
        %vm490 = vcmp.lt.s32.totalorder %v464, 0
        %vm491 = vcmp.lt.s32.totalorder %v471, 0
        %vm492 = vcmp.lt.s32.totalorder %v478, 0
        %vm493 = vcmp.lt.s32.totalorder %v485, 0
        %vm494 = vmand %vm490, %vm486
        %vm495 = vmand %vm491, %vm487
        %vm496 = vmand %vm492, %vm488
        %vm497 = vmand %vm493, %vm489
        %v498 = vadd.s32 %v464, 16
        %v499 = vadd.s32 %v471, 16
        %v500 = vadd.s32 %v478, 16
        %v501 = vadd.s32 %v485, 16
        %v502 = vsel %vm494, %v498, %v464
        %v503 = vsel %vm495, %v499, %v471
        %v504 = vsel %vm496, %v500, %v478
        %v505 = vsel %vm497, %v501, %v485
        %vm506 = vcmp.lt.s32.totalorder %v502, 14
        %vm507 = vcmp.lt.s32.totalorder %v503, 14
        %vm508 = vcmp.lt.s32.totalorder %v504, 14
        %vm509 = vcmp.lt.s32.totalorder %v505, 14
        %v510 = vsel %vm506, 1, 0
        %v511 = vsel %vm507, 1, 0
        %v512 = vsel %vm508, 1, 0
        %v513 = vsel %vm509, 1, 0
        %vm514 = vcmp.eq.s32.totalorder %v510, 1
        %vm515 = vcmp.eq.s32.totalorder %v511, 1
        %vm516 = vcmp.eq.s32.totalorder %v512, 1
        %vm517 = vcmp.eq.s32.totalorder %v513, 1
        %v518 = vsel %vm514, %v451, 0.0
        %v519 = vsel %vm515, %v452, 0.0
        %v520 = vsel %vm516, %v453, 0.0
        %v521 = vsel %vm517, %v454, 0.0
        %vm522 = vcmp.lt.s32.totalorder %v502, 15
        %vm523 = vcmp.lt.s32.totalorder %v503, 15
        %vm524 = vcmp.lt.s32.totalorder %v504, 15
        %vm525 = vcmp.lt.s32.totalorder %v505, 15
        %v526 = vsel %vm522, 1, 0
        %v527 = vsel %vm523, 1, 0
        %v528 = vsel %vm524, 1, 0
        %v529 = vsel %vm525, 1, 0
        %vm530 = vcmp.eq.s32.totalorder %v526, 1
        %vm531 = vcmp.eq.s32.totalorder %v527, 1
        %vm532 = vcmp.eq.s32.totalorder %v528, 1
        %vm533 = vcmp.eq.s32.totalorder %v529, 1
        %v534 = vsel %vm530, %v451, 0.0
        %v535 = vsel %vm531, %v452, 0.0
        %v536 = vsel %vm532, %v453, 0.0
        %v537 = vsel %vm533, %v454, 0.0
        %vm538 = vcmp.ge.s32.totalorder %v502, 1
        %vm539 = vcmp.ge.s32.totalorder %v503, 1
        %vm540 = vcmp.ge.s32.totalorder %v504, 1
        %vm541 = vcmp.ge.s32.totalorder %v505, 1
        %v542 = vsel %vm538, 1, 0
        %v543 = vsel %vm539, 1, 0
        %v544 = vsel %vm540, 1, 0
        %v545 = vsel %vm541, 1, 0
        %vm546 = vcmp.eq.s32.totalorder %v542, 1
        %vm547 = vcmp.eq.s32.totalorder %v543, 1
        %vm548 = vcmp.eq.s32.totalorder %v544, 1
        %vm549 = vcmp.eq.s32.totalorder %v545, 1
        %v550 = vsel %vm546, %v451, 0.0
        %v551 = vsel %vm547, %v452, 0.0
        %v552 = vsel %vm548, %v453, 0.0
        %v553 = vsel %vm549, %v454, 0.0
        %vm554 = vcmp.ge.s32.totalorder %v502, 2
        %vm555 = vcmp.ge.s32.totalorder %v503, 2
        %vm556 = vcmp.ge.s32.totalorder %v504, 2
        %vm557 = vcmp.ge.s32.totalorder %v505, 2
        %v558 = vsel %vm554, 1, 0
        %v559 = vsel %vm555, 1, 0
        %v560 = vsel %vm556, 1, 0
        %v561 = vsel %vm557, 1, 0
        %vm562 = vcmp.eq.s32.totalorder %v558, 1
        %vm563 = vcmp.eq.s32.totalorder %v559, 1
        %vm564 = vcmp.eq.s32.totalorder %v560, 1
        %vm565 = vcmp.eq.s32.totalorder %v561, 1
        %v566 = vsel %vm562, %v451, 0.0
        %v567 = vsel %vm563, %v452, 0.0
        %v568 = vsel %vm564, %v453, 0.0
        %v569 = vsel %vm565, %v454, 0.0
        %v570 = vld [vmem:[%s3] sm:$0xf]
        %571 = vrot.lane.b32.xlu0 %v518, 34
        %v572 = vpop.permute.xlu0 %571
        %573 = vrot.lane.b32.xlu0 %v519, 34
        %v574 = vpop.permute.xlu0 %573
        %575 = vrot.lane.b32.xlu0 %v520, 34
        %v576 = vpop.permute.xlu0 %575
        %vm577 = vcmp.lt.s32.totalorder %v427, 34
        %v578 = vsel %vm577, %v574, %v576
        %v579 = vsel %vm577, %v572, %v574
        %581 = vset.pattern.permute.xlu0 0
        %582 = vperm.xlu0 %581, %v570
        %v583 = vpop.permute.xlu0 %582
        %v585 = vmul.f32 %v583, %v579
        %v586 = vmul.f32 %v583, %v578
        %v587 = vadd.f32 %v585, 0.0
        %v588 = vadd.f32 %v586, 0.0
        %589 = vrot.lane.b32.xlu0 %v534, 33
        %v590 = vpop.permute.xlu0 %589
        %591 = vrot.lane.b32.xlu0 %v535, 33
        %v592 = vpop.permute.xlu0 %591
        %593 = vrot.lane.b32.xlu0 %v536, 33
        %v594 = vpop.permute.xlu0 %593
        %vm595 = vcmp.lt.s32.totalorder %v427, 33
        %v596 = vsel %vm595, %v592, %v594
        %v597 = vsel %vm595, %v590, %v592
        %598 = vset.pattern.permute.xlu0 1
        %599 = vperm.xlu0 %598, %v570
        %v600 = vpop.permute.xlu0 %599
        %v602 = vmul.f32 %v600, %v597
        %v603 = vmul.f32 %v600, %v596
        %v604 = vadd.f32 %v587, %v602
        %v605 = vadd.f32 %v588, %v603
        %606 = vrot.lane.b32.xlu0 %v451, 32
        %v607 = vpop.permute.xlu0 %606
        %608 = vrot.lane.b32.xlu0 %v452, 32
        %v609 = vpop.permute.xlu0 %608
        %610 = vrot.lane.b32.xlu0 %v453, 32
        %v611 = vpop.permute.xlu0 %610
        %vm612 = vcmp.lt.s32.totalorder %v427, 32
        %v613 = vsel %vm612, %v609, %v611
        %v614 = vsel %vm612, %v607, %v609
        %615 = vset.pattern.permute.xlu0 2
        %616 = vperm.xlu0 %615, %v570
        %v617 = vpop.permute.xlu0 %616
        %v619 = vmul.f32 %v617, %v614
        %v620 = vmul.f32 %v617, %v613
        %v621 = vadd.f32 %v604, %v619
        %v622 = vadd.f32 %v605, %v620
        %623 = vrot.lane.b32.xlu0 %v550, 31
        %v624 = vpop.permute.xlu0 %623
        %625 = vrot.lane.b32.xlu0 %v551, 31
        %v626 = vpop.permute.xlu0 %625
        %627 = vrot.lane.b32.xlu0 %v552, 31
        %v628 = vpop.permute.xlu0 %627
        %vm629 = vcmp.lt.s32.totalorder %v427, 31
        %v630 = vsel %vm629, %v626, %v628
        %v631 = vsel %vm629, %v624, %v626
        %632 = vset.pattern.permute.xlu0 3
        %633 = vperm.xlu0 %632, %v570
        %v634 = vpop.permute.xlu0 %633
        %v636 = vmul.f32 %v634, %v631
        %v637 = vmul.f32 %v634, %v630
        %v638 = vadd.f32 %v621, %v636
        %v639 = vadd.f32 %v622, %v637
        %640 = vrot.lane.b32.xlu0 %v566, 30
        %v641 = vpop.permute.xlu0 %640
        %642 = vrot.lane.b32.xlu0 %v567, 30
        %v643 = vpop.permute.xlu0 %642
        %644 = vrot.lane.b32.xlu0 %v568, 30
        %v645 = vpop.permute.xlu0 %644
        %vm646 = vcmp.lt.s32.totalorder %v427, 30
        %v647 = vsel %vm646, %v643, %v645
        %v648 = vsel %vm646, %v641, %v643
        %649 = vset.pattern.permute.xlu0 4
        %650 = vperm.xlu0 %649, %v570
        %v651 = vpop.permute.xlu0 %650
        %v653 = vmul.f32 %v651, %v648
        %v654 = vmul.f32 %v651, %v647
        %v655 = vadd.f32 %v638, %v653
        %v656 = vadd.f32 %v639, %v654
        %657 = vrot.lane.b32.xlu0 %v518, 18
        %v658 = vpop.permute.xlu0 %657
        %659 = vrot.lane.b32.xlu0 %v519, 18
        %v660 = vpop.permute.xlu0 %659
        %661 = vrot.lane.b32.xlu0 %v520, 18
        %v662 = vpop.permute.xlu0 %661
        %vm663 = vcmp.lt.s32.totalorder %v427, 18
        %v664 = vsel %vm663, %v660, %v662
        %v665 = vsel %vm663, %v658, %v660
        %666 = vset.pattern.permute.xlu0 5
        %667 = vperm.xlu0 %666, %v570
        %v668 = vpop.permute.xlu0 %667
        %v670 = vmul.f32 %v668, %v665
        %v671 = vmul.f32 %v668, %v664
        %v672 = vadd.f32 %v655, %v670
        %v673 = vadd.f32 %v656, %v671
        %674 = vrot.lane.b32.xlu0 %v534, 17
        %v675 = vpop.permute.xlu0 %674
        %676 = vrot.lane.b32.xlu0 %v535, 17
        %v677 = vpop.permute.xlu0 %676
        %678 = vrot.lane.b32.xlu0 %v536, 17
        %v679 = vpop.permute.xlu0 %678
        %vm680 = vcmp.lt.s32.totalorder %v427, 17
        %v681 = vsel %vm680, %v677, %v679
        %v682 = vsel %vm680, %v675, %v677
        %683 = vset.pattern.permute.xlu0 6
        %684 = vperm.xlu0 %683, %v570
        %v685 = vpop.permute.xlu0 %684
        %v687 = vmul.f32 %v685, %v682
        %v688 = vmul.f32 %v685, %v681
        %v689 = vadd.f32 %v672, %v687
        %v690 = vadd.f32 %v673, %v688
        %691 = vrot.lane.b32.xlu0 %v451, 16
        %v692 = vpop.permute.xlu0 %691
        %693 = vrot.lane.b32.xlu0 %v452, 16
        %v694 = vpop.permute.xlu0 %693
        %695 = vrot.lane.b32.xlu0 %v453, 16
        %v696 = vpop.permute.xlu0 %695
        %vm697 = vcmp.lt.s32.totalorder %v427, 16
        %v698 = vsel %vm697, %v694, %v696
        %v699 = vsel %vm697, %v692, %v694
        %700 = vset.pattern.permute.xlu0 7
        %701 = vperm.xlu0 %700, %v570
        %v702 = vpop.permute.xlu0 %701
        %v704 = vmul.f32 %v702, %v699
        %v705 = vmul.f32 %v702, %v698
        %v706 = vadd.f32 %v689, %v704
        %v707 = vadd.f32 %v690, %v705
        %708 = vrot.lane.b32.xlu0 %v550, 15
        %v709 = vpop.permute.xlu0 %708
        %710 = vrot.lane.b32.xlu0 %v551, 15
        %v711 = vpop.permute.xlu0 %710
        %712 = vrot.lane.b32.xlu0 %v552, 15
        %v713 = vpop.permute.xlu0 %712
        %vm714 = vcmp.lt.s32.totalorder %v427, 15
        %v715 = vsel %vm714, %v711, %v713
        %v716 = vsel %vm714, %v709, %v711
        %717 = vset.pattern.permute.xlu0 8
        %718 = vperm.xlu0 %717, %v570
        %v719 = vpop.permute.xlu0 %718
        %v721 = vmul.f32 %v719, %v716
        %v722 = vmul.f32 %v719, %v715
        %v723 = vadd.f32 %v706, %v721
        %v724 = vadd.f32 %v707, %v722
        %725 = vrot.lane.b32.xlu0 %v566, 14
        %v726 = vpop.permute.xlu0 %725
        %727 = vrot.lane.b32.xlu0 %v567, 14
        %v728 = vpop.permute.xlu0 %727
        %729 = vrot.lane.b32.xlu0 %v568, 14
        %v730 = vpop.permute.xlu0 %729
        %vm731 = vcmp.lt.s32.totalorder %v427, 14
        %v732 = vsel %vm731, %v728, %v730
        %v733 = vsel %vm731, %v726, %v728
        %734 = vset.pattern.permute.xlu0 9
        %735 = vperm.xlu0 %734, %v570
        %v736 = vpop.permute.xlu0 %735
        %v738 = vmul.f32 %v736, %v733
        %v739 = vmul.f32 %v736, %v732
        %v740 = vadd.f32 %v723, %v738
        %v741 = vadd.f32 %v724, %v739
        %742 = vrot.lane.b32.xlu0 %v518, 2
        %v743 = vpop.permute.xlu0 %742
        %744 = vrot.lane.b32.xlu0 %v519, 2
        %v745 = vpop.permute.xlu0 %744
        %746 = vrot.lane.b32.xlu0 %v520, 2
        %v747 = vpop.permute.xlu0 %746
        %vm748 = vcmp.lt.s32.totalorder %v427, 2
        %v749 = vsel %vm748, %v745, %v747
        %v750 = vsel %vm748, %v743, %v745
        %751 = vset.pattern.permute.xlu0 10
        %752 = vperm.xlu0 %751, %v570
        %v753 = vpop.permute.xlu0 %752
        %v755 = vmul.f32 %v753, %v750
        %v756 = vmul.f32 %v753, %v749
        %v757 = vadd.f32 %v740, %v755
        %v758 = vadd.f32 %v741, %v756
        %759 = vrot.lane.b32.xlu0 %v534, 1
        %v760 = vpop.permute.xlu0 %759
        %761 = vrot.lane.b32.xlu0 %v535, 1
        %v762 = vpop.permute.xlu0 %761
        %763 = vrot.lane.b32.xlu0 %v536, 1
        %v764 = vpop.permute.xlu0 %763
        %vm765 = vcmp.lt.s32.totalorder %v427, 1
        %v766 = vsel %vm765, %v762, %v764
        %v767 = vsel %vm765, %v760, %v762
        %768 = vset.pattern.permute.xlu0 11
        %769 = vperm.xlu0 %768, %v570
        %v770 = vpop.permute.xlu0 %769
        %v772 = vmul.f32 %v770, %v767
        %v773 = vmul.f32 %v770, %v766
        %v774 = vadd.f32 %v757, %v772
        %v775 = vadd.f32 %v758, %v773
        %776 = vset.pattern.permute.xlu0 12
        %777 = vperm.xlu0 %776, %v570
        %v778 = vpop.permute.xlu0 %777
        %v780 = vmul.f32 %v778, %v452
        %v781 = vmul.f32 %v778, %v453
        %v782 = vadd.f32 %v774, %v780
        %v783 = vadd.f32 %v775, %v781
        %784 = vrot.lane.b32.xlu0 %v551, 127
        %v785 = vpop.permute.xlu0 %784
        %786 = vrot.lane.b32.xlu0 %v552, 127
        %v787 = vpop.permute.xlu0 %786
        %788 = vrot.lane.b32.xlu0 %v553, 127
        %v789 = vpop.permute.xlu0 %788
        %vm790 = vcmp.lt.s32.totalorder %v427, 127
        %v791 = vsel %vm790, %v787, %v789
        %v792 = vsel %vm790, %v785, %v787
        %793 = vset.pattern.permute.xlu0 13
        %794 = vperm.xlu0 %793, %v570
        %v795 = vpop.permute.xlu0 %794
        %v797 = vmul.f32 %v795, %v792
        %v798 = vmul.f32 %v795, %v791
        %v799 = vadd.f32 %v782, %v797
        %v800 = vadd.f32 %v783, %v798
        %801 = vrot.lane.b32.xlu0 %v567, 126
        %v802 = vpop.permute.xlu0 %801
        %803 = vrot.lane.b32.xlu0 %v568, 126
        %v804 = vpop.permute.xlu0 %803
        %805 = vrot.lane.b32.xlu0 %v569, 126
        %v806 = vpop.permute.xlu0 %805
        %vm807 = vcmp.lt.s32.totalorder %v427, 126
        %v808 = vsel %vm807, %v804, %v806
        %v809 = vsel %vm807, %v802, %v804
        %810 = vset.pattern.permute.xlu0 14
        %811 = vperm.xlu0 %810, %v570
        %v812 = vpop.permute.xlu0 %811
        %v814 = vmul.f32 %v812, %v809
        %v815 = vmul.f32 %v812, %v808
        %v816 = vadd.f32 %v799, %v814
        %v817 = vadd.f32 %v800, %v815
        %818 = vrot.lane.b32.xlu0 %v519, 114
        %v819 = vpop.permute.xlu0 %818
        %820 = vrot.lane.b32.xlu0 %v520, 114
        %v821 = vpop.permute.xlu0 %820
        %822 = vrot.lane.b32.xlu0 %v521, 114
        %v823 = vpop.permute.xlu0 %822
        %vm824 = vcmp.lt.s32.totalorder %v427, 114
        %v825 = vsel %vm824, %v821, %v823
        %v826 = vsel %vm824, %v819, %v821
        %827 = vset.pattern.permute.xlu0 15
        %828 = vperm.xlu0 %827, %v570
        %v829 = vpop.permute.xlu0 %828
        %v831 = vmul.f32 %v829, %v826
        %v832 = vmul.f32 %v829, %v825
        %v833 = vadd.f32 %v816, %v831
        %v834 = vadd.f32 %v817, %v832
        %835 = vrot.lane.b32.xlu0 %v535, 113
        %v836 = vpop.permute.xlu0 %835
        %837 = vrot.lane.b32.xlu0 %v536, 113
        %v838 = vpop.permute.xlu0 %837
        %839 = vrot.lane.b32.xlu0 %v537, 113
        %v840 = vpop.permute.xlu0 %839
        %vm841 = vcmp.lt.s32.totalorder %v427, 113
        %v842 = vsel %vm841, %v838, %v840
        %v843 = vsel %vm841, %v836, %v838
        %844 = vset.pattern.permute.xlu0 16
        %845 = vperm.xlu0 %844, %v570
        %v846 = vpop.permute.xlu0 %845
        %v848 = vmul.f32 %v846, %v843
        %v849 = vmul.f32 %v846, %v842
        %v850 = vadd.f32 %v833, %v848
        %v851 = vadd.f32 %v834, %v849
        %852 = vrot.lane.b32.xlu0 %v452, 112
        %v853 = vpop.permute.xlu0 %852
        %854 = vrot.lane.b32.xlu0 %v453, 112
        %v855 = vpop.permute.xlu0 %854
        %856 = vrot.lane.b32.xlu0 %v454, 112
        %v857 = vpop.permute.xlu0 %856
        %vm858 = vcmp.lt.s32.totalorder %v427, 112
        %v859 = vsel %vm858, %v855, %v857
        %v860 = vsel %vm858, %v853, %v855
        %861 = vset.pattern.permute.xlu0 17
        %862 = vperm.xlu0 %861, %v570
        %v863 = vpop.permute.xlu0 %862
        %v865 = vmul.f32 %v863, %v860
        %v866 = vmul.f32 %v863, %v859
        %v867 = vadd.f32 %v850, %v865
        %v868 = vadd.f32 %v851, %v866
        %869 = vrot.lane.b32.xlu0 %v551, 111
        %v870 = vpop.permute.xlu0 %869
        %871 = vrot.lane.b32.xlu0 %v552, 111
        %v872 = vpop.permute.xlu0 %871
        %873 = vrot.lane.b32.xlu0 %v553, 111
        %v874 = vpop.permute.xlu0 %873
        %vm875 = vcmp.lt.s32.totalorder %v427, 111
        %v876 = vsel %vm875, %v872, %v874
        %v877 = vsel %vm875, %v870, %v872
        %878 = vset.pattern.permute.xlu0 18
        %879 = vperm.xlu0 %878, %v570
        %v880 = vpop.permute.xlu0 %879
        %v882 = vmul.f32 %v880, %v877
        %v883 = vmul.f32 %v880, %v876
        %v884 = vadd.f32 %v867, %v882
        %v885 = vadd.f32 %v868, %v883
        %886 = vrot.lane.b32.xlu0 %v567, 110
        %v887 = vpop.permute.xlu0 %886
        %888 = vrot.lane.b32.xlu0 %v568, 110
        %v889 = vpop.permute.xlu0 %888
        %890 = vrot.lane.b32.xlu0 %v569, 110
        %v891 = vpop.permute.xlu0 %890
        %vm892 = vcmp.lt.s32.totalorder %v427, 110
        %v893 = vsel %vm892, %v889, %v891
        %v894 = vsel %vm892, %v887, %v889
        %895 = vset.pattern.permute.xlu0 19
        %896 = vperm.xlu0 %895, %v570
        %v897 = vpop.permute.xlu0 %896
        %v899 = vmul.f32 %v897, %v894
        %v900 = vmul.f32 %v897, %v893
        %v901 = vadd.f32 %v884, %v899
        %v902 = vadd.f32 %v885, %v900
        %903 = vrot.lane.b32.xlu0 %v519, 98
        %v904 = vpop.permute.xlu0 %903
        %905 = vrot.lane.b32.xlu0 %v520, 98
        %v906 = vpop.permute.xlu0 %905
        %907 = vrot.lane.b32.xlu0 %v521, 98
        %v908 = vpop.permute.xlu0 %907
        %vm909 = vcmp.lt.s32.totalorder %v427, 98
        %v910 = vsel %vm909, %v906, %v908
        %v911 = vsel %vm909, %v904, %v906
        %912 = vset.pattern.permute.xlu0 20
        %913 = vperm.xlu0 %912, %v570
        %v914 = vpop.permute.xlu0 %913
        %v916 = vmul.f32 %v914, %v911
        %v917 = vmul.f32 %v914, %v910
        %v918 = vadd.f32 %v901, %v916
        %v919 = vadd.f32 %v902, %v917
        %920 = vrot.lane.b32.xlu0 %v535, 97
        %v921 = vpop.permute.xlu0 %920
        %922 = vrot.lane.b32.xlu0 %v536, 97
        %v923 = vpop.permute.xlu0 %922
        %924 = vrot.lane.b32.xlu0 %v537, 97
        %v925 = vpop.permute.xlu0 %924
        %vm926 = vcmp.lt.s32.totalorder %v427, 97
        %v927 = vsel %vm926, %v923, %v925
        %v928 = vsel %vm926, %v921, %v923
        %929 = vset.pattern.permute.xlu0 21
        %930 = vperm.xlu0 %929, %v570
        %v931 = vpop.permute.xlu0 %930
        %v933 = vmul.f32 %v931, %v928
        %v934 = vmul.f32 %v931, %v927
        %v935 = vadd.f32 %v918, %v933
        %v936 = vadd.f32 %v919, %v934
        %937 = vrot.lane.b32.xlu0 %v452, 96
        %v938 = vpop.permute.xlu0 %937
        %939 = vrot.lane.b32.xlu0 %v453, 96
        %v940 = vpop.permute.xlu0 %939
        %941 = vrot.lane.b32.xlu0 %v454, 96
        %v942 = vpop.permute.xlu0 %941
        %vm943 = vcmp.lt.s32.totalorder %v427, 96
        %v944 = vsel %vm943, %v940, %v942
        %v945 = vsel %vm943, %v938, %v940
        %946 = vset.pattern.permute.xlu0 22
        %947 = vperm.xlu0 %946, %v570
        %v948 = vpop.permute.xlu0 %947
        %v950 = vmul.f32 %v948, %v945
        %v951 = vmul.f32 %v948, %v944
        %v952 = vadd.f32 %v935, %v950
        %v953 = vadd.f32 %v936, %v951
        %954 = vrot.lane.b32.xlu0 %v551, 95
        %v955 = vpop.permute.xlu0 %954
        %956 = vrot.lane.b32.xlu0 %v552, 95
        %v957 = vpop.permute.xlu0 %956
        %958 = vrot.lane.b32.xlu0 %v553, 95
        %v959 = vpop.permute.xlu0 %958
        %vm960 = vcmp.lt.s32.totalorder %v427, 95
        %v961 = vsel %vm960, %v957, %v959
        %v962 = vsel %vm960, %v955, %v957
        %963 = vset.pattern.permute.xlu0 23
        %964 = vperm.xlu0 %963, %v570
        %v965 = vpop.permute.xlu0 %964
        %v967 = vmul.f32 %v965, %v962
        %v968 = vmul.f32 %v965, %v961
        %v969 = vadd.f32 %v952, %v967
        %v970 = vadd.f32 %v953, %v968
        %971 = vrot.lane.b32.xlu0 %v567, 94
        %v972 = vpop.permute.xlu0 %971
        %973 = vrot.lane.b32.xlu0 %v568, 94
        %v974 = vpop.permute.xlu0 %973
        %975 = vrot.lane.b32.xlu0 %v569, 94
        %v976 = vpop.permute.xlu0 %975
        %vm977 = vcmp.lt.s32.totalorder %v427, 94
        %v978 = vsel %vm977, %v974, %v976
        %v979 = vsel %vm977, %v972, %v974
        %980 = vset.pattern.permute.xlu0 24
        %981 = vperm.xlu0 %980, %v570
        %v982 = vpop.permute.xlu0 %981
        %v984 = vmul.f32 %v982, %v979
        %v985 = vmul.f32 %v982, %v978
        %v986 = vadd.f32 %v969, %v984
        %v987 = vadd.f32 %v970, %v985
        %v988 = vld [vmem:[%s4] sm:$0xf]
        %990 = vset.pattern.permute.xlu0 0
        %991 = vperm.xlu0 %990, %v988
        %v992 = vpop.permute.xlu0 %991
        %v994 = vadd.f32 %v986, %v992
        %v995 = vadd.f32 %v987, %v992
        %v996 = vxor.u32 %v994, 2147483648
        %v997 = vxor.u32 %v995, 2147483648
        %v998 = vmul.f32 %v996, 1.442695
        %v999 = vpow.pop %v998
        %v1000 = vmul.f32 %v997, 1.442695
        %v1001 = vpow.pop %v1000
        %v1002 = vadd.f32 %v999, 1.0
        %v1003 = vadd.f32 %v1001, 1.0
        %v1004 = vrcp.pop %v1002
        %v1005 = vmul.f32 1.0, %v1004
        %v1006 = vrcp.pop %v1003
        %v1007 = vmul.f32 1.0, %v1006
        %v1008 = vmul.f32 %v994, %v1005
        %v1009 = vmul.f32 %v995, %v1007
        %1010 = vst [vmem:[%s240] sm:$0x3] %v452
        %1011 = vst [vmem:[%s240 + $0x8] sm:$0x3] %v453
        %v1014 = vrot.slane %v1008, 6
        %v1015 = vrot.slane %v1009, 6
        %1018 = vst [vmem:[%s240] sm:$0xc] %v1014
        %1019 = vst [vmem:[%s240 + $0x8] sm:$0xc] %v1015
        %v1022 = vrot.slane %v452, 6
        %v1023 = vrot.slane %v453, 6
        %1026 = vst [vmem:[%s240] sm:$0x30] %v1022
        %1027 = vst [vmem:[%s240 + $0x8] sm:$0x30] %v1023
        %v1028 = vrot.slane %v1008, 4
        %v1029 = vrot.slane %v1009, 4
        %1032 = vst [vmem:[%s240] sm:$0xc0] %v1028
        %1033 = vst [vmem:[%s240 + $0x8] sm:$0xc0] %v1029
        %s1034 = sand.u32 %s140, 1
        %s1035 = scalar_lea.sflag [#allocation4], %s1034
        %s1036 = sand.u32 %s140, 1
        %s1037 = smul.addr %s1036, 16
        %s1038 = scalar_lea.vmem [#allocation5], %s1037
        // Predicated region
        $region45: #{tpu_custom_call.1} parent=39 // pred_check
          %p1039 = pneg %p150
        $region46: #{tpu_custom_call.1} parent=39 // pred_check_branch
          %1041 = sbr.rel (%p1039) target = $region48
        $region47: #{tpu_custom_call.1} parent=39 // pred_region
          %s1043 = ssub.s32 256, 256
          %1044 = vsyncadd %s1035, %s1043
          %s1045 = smul.addr %s22, 2
          %s1046 = smul.addr %s1045, 128
          %s1047 = scalar_lea.hbm %s5, %s1046
          %s1049 = sshll.u32 %s1038, 4
          %s1050 = int_to_ptr.vmem [resolvable:$true] %s1049
          %1052 = dma.vmem_to_hbm [thread:$0]  %s1050, 256, %s1047, %s1035
        $region48: #{tpu_custom_call.1} parent=39 // pred_fallthru
          _
      $region40: #{tpu_custom_call.1} parent=5 // pred_fallthru
        _
      %p1053 = scmp.le.s32.totalorder 2, %s17
      // Predicated region
      $region49: #{tpu_custom_call.1} parent=5 // pred_check
        %p1054 = pneg %p1053
      $region50: #{tpu_custom_call.1} parent=5 // pred_check_branch
        %1056 = sbr.rel (%p1054) target = $region52
      $region51: #{tpu_custom_call.1} parent=5 // pred_region
        %s1057 = ssub.s32 %s17, 2
        // Predicated region
        $region53: #{tpu_custom_call.1} parent=51 // pred_check
          %p1058 = pneg %p156
        $region54: #{tpu_custom_call.1} parent=51 // pred_check_branch
          %1060 = sbr.rel (%p1058) target = $region56
        $region55: #{tpu_custom_call.1} parent=51 // pred_region
          %s1061 = sand.u32 %s141, 1
          %s1062 = scalar_lea.sflag [#allocation4], %s1061
          %s1063 = sand.u32 %s141, 1
          %s1064 = smul.addr %s1063, 16
          %s1065 = scalar_lea.vmem [#allocation5], %s1064
          %1066 = dma.done %s1062, 256
        $region56: #{tpu_custom_call.1} parent=51 // pred_fallthru
          _
      $region52: #{tpu_custom_call.1} parent=5 // pred_fallthru
        _
    $region6: #{tpu_custom_call.1} parent=1 // loop_footer
      %s21 = sadd.s32 1, %s17
    $region7: #{tpu_custom_call.1} parent=1 // loop_footer_branch
      %16 = sbr.rel target = $region3
    $region8: #{tpu_custom_call.1} parent=1 // loop_exit
      _
    %1067 = vsyncpa [#allocation3], 1
    %s1068 = scalar_lea.sflag [#allocation3], 1
    %1069 = vsyncpa %s1068, 1
    %1070 = vsyncpa [#allocation4], 1
    %s1071 = scalar_lea.sflag [#allocation4], 1
    %1072 = vsyncpa %s1071, 1

</llo_original>
